<compile_context>
chip_gen: v5e
topology: v5e:2x2
jax: 0.10.0
libtpu: 0.0.40
codegen_flags: <defaults>
</compile_context>

<pallas_src>
import functools

import jax
import jax.numpy as jnp
from jax.experimental import pallas as pl
from jax.experimental.pallas import tpu as pltpu


def _round_up(x, m):
    return ((x + m - 1) // m) * m


def _vmem_limit_bytes(default=48 * 1024 * 1024):
    """Generation-aware scoped-VMEM limit (v7x ~54 MiB, v5e/v6e ~108 MiB)."""
    try:
        cap = int(pltpu.get_tpu_info().vmem_capacity_bytes)
        return int(max(32 << 20, min(cap - (8 << 20), int(cap * 0.85))))
    except Exception:
        return default


# ----------------------------------------------------------------------------
# Standalone InverseLinear kernel (the spec module): y = (x - b) @ inv(W+eps I).T
# ----------------------------------------------------------------------------
def _inverse_linear_kernel(x_ref, b_ref, w_ref, o_ref):
    # w_ref holds inv(W + eps*I).T, precomputed in the wrapper (XLA side).
    o_ref[...] = jnp.dot(x_ref[...] - b_ref[0:1, :], w_ref[...],
                         preferred_element_type=jnp.float32).astype(o_ref.dtype)


def inverse_linear_forward(x, weight, bias=None, *, eps=1e-6, row_tile=512):
    """InverseLinear.forward for x of shape (..., D)."""
    D = weight.shape[0]
    lead = x.shape[:-1]
    x2 = x.reshape(-1, D).astype(jnp.float32)
    R = x2.shape[0]

    P = _round_up(D, 128)                          # lane-dense feature dim
    TM = min(_round_up(row_tile, 8), _round_up(R, 8))
    Rp = _round_up(R, TM)

    inv = jnp.linalg.inv(weight.astype(jnp.float32)
                         + eps * jnp.eye(D, dtype=jnp.float32))
    b = bias if bias is not None else jnp.zeros((D,), jnp.float32)

    xp = jnp.pad(x2, ((0, Rp - R), (0, P - D)))
    bp = jnp.pad(b.astype(jnp.float32).reshape(1, D), ((0, 7), (0, P - D)))
    wp = jnp.pad(inv.T, ((0, P - D), (0, P - D)))

    out = pl.pallas_call(
        _inverse_linear_kernel,
        out_shape=jax.ShapeDtypeStruct((Rp, P), jnp.float32),
        grid=(Rp // TM,),
        in_specs=[
            pl.BlockSpec((TM, P), lambda i: (i, 0)),      # x rows (tiled)
            pl.BlockSpec((8, P), lambda i: (0, 0)),       # bias (constant idx)
            pl.BlockSpec((P, P), lambda i: (0, 0)),       # inv(W+eps I).T
        ],
        out_specs=pl.BlockSpec((TM, P), lambda i: (i, 0)),
        compiler_params=pltpu.CompilerParams(
            dimension_semantics=("parallel",),
            vmem_limit_bytes=_vmem_limit_bytes(),
        ),
    )(xp, bp, wp)
    return out[:R, :D].reshape(*lead, D)


# ----------------------------------------------------------------------------
# Full HiroLRANInverse forward (encoder -> latent recurrence -> decoder built
# from InverseLeakyReLU + InverseLinear), grid = (batch tiles, time chunks).
# ----------------------------------------------------------------------------
def _hiro_kernel(slope, x0_ref, u_ref, me_ref, md_ref, vecs_ref, o_ref,
                 carry_ref, z1_ref):
    """One (batch tile, time chunk) grid step.

    x0_ref : (TB, P)       x at t=0, compute dtype (lane padded)
    u_ref  : (TC, TB, P)   actuator u for this time chunk, compute dtype
    me_ref : (4, P, P) cd  encoder params: [W0.T, W1.T, W2.T, B_w.T]
    md_ref : (3, P, P) f32 decoder params: [inv(W2+eI).T, inv(W1+eI).T, inv(W0+eI).T]
    vecs_ref: (8, P) f32   rows 0..3 = b0, b1, b2, clip(a_diag)
    o_ref  : (TC, TB, P)   output chunk (out_dtype)
    carry_ref: (TB, P) f32 recurrence carry, persists across time chunks
    z1_ref : (TC, TB, P) f32 staging for the latent chunk fed to the decoder
    """
    TC, TB, P = o_ref.shape
    cd = x0_ref.dtype
    inv_slope = 1.0 / slope                       # multiply on VPU, not divide

    vecs = vecs_ref[...]                          # tiny, load once
    a_b = jnp.broadcast_to(vecs[3:4, :], (TB, P))   # hoisted broadcast

    # ---- encoder (3 x Linear + LeakyReLU) on timestep 0 only ----------------
    @pl.when(pl.program_id(1) == 0)
    def _():
        z = x0_ref[...]
        for l in range(3):
            z = jnp.dot(z.astype(cd), me_ref[l],
                        preferred_element_type=jnp.float32) + vecs[l:l + 1, :]
            z = jnp.where(z >= 0.0, z, slope * z)
        carry_ref[...] = z

    # ---- B @ u for this chunk: one MXU matmul over TC*TB rows ---------------
    bu = jnp.dot(u_ref[...].reshape(TC * TB, P), me_ref[3],
                 preferred_element_type=jnp.float32).reshape(TC, TB, P)

    # ---- serial latent recurrence, fused with B.u (f32 carry) ---------------
    prev = carry_ref[...]
    for t in range(TC):                           # TC is static -> unrolled
        prev = prev * a_b + bu[t]
        z1_ref[t] = prev
    carry_ref[...] = prev

    # ---- decoder: 3 x (InverseLeakyReLU + InverseLinear), f32 inverse path --
    h = z1_ref[...].reshape(TC * TB, P)
    for l, bl in ((0, 2), (1, 1), (2, 0)):
        h = jnp.where(h < 0.0, h * inv_slope, h)
        h = jnp.dot(h - vecs[bl:bl + 1, :], md_ref[l],
                    preferred_element_type=jnp.float32)
    o_ref[...] = h.reshape(TC, TB, P).astype(o_ref.dtype)


def hiro_lran_inverse_forward(padded_input, params, *, negative_slope=0.1,
                              eps=1e-6, compute_dtype=jnp.bfloat16,
                              out_dtype=jnp.float32,
                              batch_tile=None, time_chunk=8):
    """HiroLRANInverse.forward with reset_probability=0, nwarmup=0.

    compute_dtype : MXU operand dtype for the encoder / B.u matmuls (the
        decoder inverse path always runs in float32).
    out_dtype     : dtype of the HBM output slab (bf16 halves writeback).
    batch_tile    : rows per grid step (multiple of 8). Default auto-sizes to
        <=128 while keeping >=2 parallel grid steps when the batch allows.
    time_chunk    : timesteps per grid step; caps decoder/B.u intermediates.
    """
    W0, W1, W2 = params["W0"], params["W1"], params["W2"]
    b0, b1, b2 = params["b0"], params["b1"], params["b2"]
    a_diag, B_w = params["a_diag"], params["B_w"]

    D = W0.shape[0]
    act_len = B_w.shape[1]
    bsz, T, _ = padded_input.shape
    P = _round_up(max(D, act_len), 128)

    # --- tiling --------------------------------------------------------------
    bsz8 = _round_up(bsz, 8)
    if batch_tile is None:
        batch_tile = min(128, bsz8)
        if batch_tile == bsz8 and bsz8 >= 16:
            batch_tile = _round_up(bsz8 // 2, 8)     # >=2 parallel grid steps
    assert batch_tile % 8 == 0 and batch_tile > 0
    TB = batch_tile
    bsz_pad = _round_up(bsz, TB)

    TC = max(1, min(int(time_chunk), T))
    T_pad = _round_up(T, TC)

    # --- parameter glue (XLA side): regularized inverses, packing, padding ---
    eye = jnp.eye(D, dtype=jnp.float32)
    inv0 = jnp.linalg.inv(W0.astype(jnp.float32) + eps * eye)
    inv1 = jnp.linalg.inv(W1.astype(jnp.float32) + eps * eye)
    inv2 = jnp.linalg.inv(W2.astype(jnp.float32) + eps * eye)

    def pad_mat(m):
        r, c = m.shape
        return jnp.pad(m.astype(jnp.float32), ((0, P - r), (0, P - c)))

    def pad_vec(v):
        return jnp.pad(v.astype(jnp.float32), (0, P - v.shape[0]))

    mats_enc = jnp.stack([pad_mat(W0.T), pad_mat(W1.T), pad_mat(W2.T),
                          pad_mat(B_w.T)], axis=0).astype(compute_dtype)
    mats_dec = jnp.stack([pad_mat(inv2.T), pad_mat(inv1.T), pad_mat(inv0.T)],
                         axis=0)                                     # f32
    a_clip = jnp.clip(a_diag.astype(jnp.float32), -0.95, 0.95)
    vecs = jnp.stack([pad_vec(b0), pad_vec(b1), pad_vec(b2), pad_vec(a_clip)]
                     + [jnp.zeros((P,), jnp.float32)] * 4, axis=0)   # (8, P)

    # --- layout plumbing: slice live lanes first, then transpose / jnp.pad ---
    x0 = padded_input[:, 0, :D].astype(compute_dtype)                # (bsz, D)
    x0p = jnp.pad(x0, ((0, bsz_pad - bsz), (0, P - D)))

    u = padded_input[:, :, D + act_len:]                             # (bsz, T, A)
    u_tm = jnp.transpose(u, (1, 0, 2)).astype(compute_dtype)         # (T, bsz, A)
    u_p = jnp.pad(u_tm, ((0, T_pad - T), (0, bsz_pad - bsz), (0, P - act_len)))

    grid = (bsz_pad // TB, T_pad // TC)
    kernel = functools.partial(_hiro_kernel, float(negative_slope))

    out_tm = pl.pallas_call(
        kernel,
        out_shape=jax.ShapeDtypeStruct((T_pad, bsz_pad, P), out_dtype),
        grid_spec=pltpu.PrefetchScalarGridSpec(
            num_scalar_prefetch=0,
            grid=grid,
            in_specs=[
                pl.BlockSpec((TB, P), lambda i, t: (i, 0)),          # x0
                pl.BlockSpec((TC, TB, P), lambda i, t: (t, i, 0)),   # u chunk
                pl.BlockSpec((4, P, P), lambda i, t: (0, 0, 0)),     # enc mats
                pl.BlockSpec((3, P, P), lambda i, t: (0, 0, 0)),     # dec mats
                pl.BlockSpec((8, P), lambda i, t: (0, 0)),           # vecs
            ],
            out_specs=pl.BlockSpec((TC, TB, P), lambda i, t: (t, i, 0)),
            scratch_shapes=[
                pltpu.VMEM((TB, P), jnp.float32),       # recurrence carry
                pltpu.VMEM((TC, TB, P), jnp.float32),   # z1 staging
            ],
        ),
        compiler_params=pltpu.CompilerParams(
            dimension_semantics=("parallel", "arbitrary"),
            vmem_limit_bytes=_vmem_limit_bytes(),
        ),
    )(x0p, u_p, mats_enc, mats_dec, vecs)

    # undo layout: slice live region first, then transpose back to batch-major.
    return jnp.transpose(out_tm[:T, :bsz, :D], (1, 0, 2))


# ----------------------------------------------------------------------------
# Parameter init + pure-JAX reference for validation.
# ----------------------------------------------------------------------------
def make_params(key, output_dim, input_dim, noise_std=1e-3):
    D = output_dim
    act_len = (input_dim - D) // 2
    k = jax.random.split(key, 6)
    eye = jnp.eye(D, dtype=jnp.float32)
    W0 = eye + noise_std * jax.random.normal(k[0], (D, D), jnp.float32)
    W1 = eye + noise_std * jax.random.normal(k[1], (D, D), jnp.float32)
    W2 = eye + noise_std * jax.random.normal(k[2], (D, D), jnp.float32)
    b0 = jnp.zeros((D,), jnp.float32)
    b1 = jnp.zeros((D,), jnp.float32)
    b2 = jnp.zeros((D,), jnp.float32)
    a_diag = (2.0 * jax.random.uniform(k[3], (D,), jnp.float32) - 1.0) * 0.8
    bound = 1.0 / (act_len ** 0.5)
    B_w = jax.random.uniform(k[4], (D, act_len), jnp.float32, -bound, bound)
    return dict(W0=W0, W1=W1, W2=W2, b0=b0, b1=b1, b2=b2,
                a_diag=a_diag, B_w=B_w)


def reference_forward(padded_input, params, negative_slope=0.1, eps=1e-6,
                      compute_dtype=jnp.float32):
    """Pure-JAX reference.  With compute_dtype=bf16 it mirrors the kernel's
    cast points (bf16 encoder/B.u operands, f32 accumulation, f32 decoder)."""
    cd = compute_dtype
    W0, W1, W2 = params["W0"], params["W1"], params["W2"]
    b0, b1, b2 = params["b0"], params["b1"], params["b2"]
    D = W0.shape[0]
    act_len = params["B_w"].shape[1]
    slope = negative_slope

    x0 = padded_input[:, 0, :D]
    u = padded_input[:, :, D + act_len:]

    z = x0
    for W, b in ((W0, b0), (W1, b1), (W2, b2)):
        z = jnp.dot(z.astype(cd), W.T.astype(cd),
                    preferred_element_type=jnp.float32) + b
        z = jnp.where(z >= 0, z, slope * z)

    a = jnp.clip(params["a_diag"], -0.95, 0.95)
    Bu = jnp.dot(u.astype(cd), params["B_w"].T.astype(cd),
                 preferred_element_type=jnp.float32)          # (bsz, T, D)
    prev = z
    outs = []
    for t in range(padded_input.shape[1]):
        prev = prev * a + Bu[:, t, :]
        outs.append(prev)
    z1 = jnp.stack(outs, axis=1)

    eye = jnp.eye(D, dtype=jnp.float32)
    h = z1
    for W, b in ((W2, b2), (W1, b1), (W0, b0)):
        h = jnp.where(h < 0, h / slope, h)
        h = jnp.dot(h - b, jnp.linalg.inv(W + eps * eye).T,
                    preferred_element_type=jnp.float32)
    return h


if __name__ == "__main__":
    bsz, seq_len = 12, 8
    output_dim = 32            # state_dim = latent_dim = encoder_dim
    input_dim = 64             # actuator_length = (64 - 32) // 2 = 16

    root = jax.random.PRNGKey(0)
    k_params, k_data, k_lin = jax.random.split(root, 3)
    params = make_params(k_params, output_dim, input_dim)
    padded_input = jax.random.normal(k_data, (bsz, seq_len, input_dim),
                                     jnp.float32)

    ref_f32 = reference_forward(padded_input, params, negative_slope=0.1)

    # f32 path, auto batch_tile (2 batch tiles), single time chunk.
    out_f32 = hiro_lran_inverse_forward(padded_input, params,
                                        negative_slope=0.1,
                                        compute_dtype=jnp.float32)
    out_f32 = jax.block_until_ready(out_f32)
    assert out_f32.shape == (bsz, seq_len, output_dim)
    assert bool(jnp.allclose(out_f32, ref_f32, atol=5e-2, rtol=5e-2))

    # f32 path with explicit small tiles: exercises the (batch x time) grid and
    # the recurrence carry across time chunks.
    out_tiled = hiro_lran_inverse_forward(padded_input, params,
                                          negative_slope=0.1,
                                          compute_dtype=jnp.float32,
                                          batch_tile=8, time_chunk=4)
    out_tiled = jax.block_until_ready(out_tiled)
    assert bool(jnp.allclose(out_tiled, ref_f32, atol=5e-2, rtol=5e-2))

    # bf16 encoder/B.u path with f32 inverse decoder and bf16 output writeback,
    # validated against the matching-cast reference (same bf16 cast points).
    ref_bf16 = reference_forward(padded_input, params, negative_slope=0.1,
                                 compute_dtype=jnp.bfloat16)
    out_bf16 = hiro_lran_inverse_forward(padded_input, params,
                                         negative_slope=0.1,
                                         compute_dtype=jnp.bfloat16,
                                         out_dtype=jnp.bfloat16,
                                         batch_tile=16, time_chunk=4)
    out_bf16 = jax.block_until_ready(out_bf16)
    assert bool(jnp.allclose(out_bf16.astype(jnp.float32), ref_bf16,
                             atol=5e-2, rtol=5e-2))

    # Standalone InverseLinear (the literal spec module).
    kw, kb, kx = jax.random.split(k_lin, 3)
    D = output_dim
    W_lin = jnp.eye(D, dtype=jnp.float32) + 0.05 * jax.random.normal(
        kw, (D, D), jnp.float32)
    b_lin = 0.1 * jax.random.normal(kb, (D,), jnp.float32)
    x_lin = jax.random.normal(kx, (2, 16, D), jnp.float32)
    out_lin = jax.block_until_ready(
        inverse_linear_forward(x_lin, W_lin, b_lin, eps=1e-6))
    ref_lin = (x_lin - b_lin) @ jnp.linalg.inv(
        W_lin + 1e-6 * jnp.eye(D, dtype=jnp.float32)).T
    assert bool(jnp.allclose(out_lin, ref_lin, atol=2e-2, rtol=2e-2))

    print("KERNEL_OK")
</pallas_src>

<mosaic_0001>
module attributes {stable_mosaic.version = 11 : i64} {
  func.func @_hiro_kernel(%arg0: i32, %arg1: i32, %arg2: memref<8x128xf32, #tpu.memory_space<vmem>>, %arg3: memref<8x8x128xf32, #tpu.memory_space<vmem>>, %arg4: memref<4x128x128xf32, #tpu.memory_space<vmem>>, %arg5: memref<3x128x128xf32, #tpu.memory_space<vmem>>, %arg6: memref<8x128xf32, #tpu.memory_space<vmem>>, %arg7: memref<8x8x128xf32, #tpu.memory_space<vmem>>, %arg8: memref<8x128xf32, #tpu.memory_space<vmem>>, %arg9: memref<8x8x128xf32, #tpu.memory_space<vmem>>) attributes {dimension_semantics = [#tpu.dimension_semantics<parallel>, #tpu.dimension_semantics<arbitrary>], iteration_bounds = array<i64: 2, 1>, scalar_prefetch = 0 : i64, scratch_operands = 2 : i64, tpu.core_type = #tpu.core_type<tc>, window_params = [{transform_indices = @transform_0, window_bounds = array<i64: 8, 128>}, {transform_indices = @transform_1, window_bounds = array<i64: 8, 8, 128>}, {pipeline_mode = #tpu.pipeline_mode<synchronous>, transform_indices = @transform_2, window_bounds = array<i64: 4, 128, 128>}, {pipeline_mode = #tpu.pipeline_mode<synchronous>, transform_indices = @transform_3, window_bounds = array<i64: 3, 128, 128>}, {pipeline_mode = #tpu.pipeline_mode<synchronous>, transform_indices = @transform_4, window_bounds = array<i64: 8, 128>}, {transform_indices = @transform_5, window_bounds = array<i64: 8, 8, 128>}]} {
    %c0 = arith.constant 0 : index
    %c0_0 = arith.constant 0 : index
    %0 = vector.load %arg6[%c0, %c0_0] : memref<8x128xf32, #tpu.memory_space<vmem>>, vector<8x128xf32>
    %1 = vector.extract_strided_slice %0 {offsets = [3, 0], sizes = [1, 128], strides = [1, 1]} : vector<8x128xf32> to vector<1x128xf32>
    %2 = vector.shape_cast %1 : vector<1x128xf32> to vector<1x128xf32>
    %3 = vector.broadcast %2 : vector<1x128xf32> to vector<8x128xf32>
    %c0_i32 = arith.constant 0 : i32
    %4 = arith.cmpi eq, %arg1, %c0_i32 : i32
    %5 = arith.extui %4 : i1 to i32
    %c0_i32_1 = arith.constant 0 : i32
    %6 = arith.cmpi ne, %5, %c0_i32_1 : i32
    scf.if %6 {
      %c0_53 = arith.constant 0 : index
      %c0_54 = arith.constant 0 : index
      %108 = vector.load %arg2[%c0_53, %c0_54] : memref<8x128xf32, #tpu.memory_space<vmem>>, vector<8x128xf32>
      %c0_55 = arith.constant 0 : index
      %c0_56 = arith.constant 0 : index
      %c0_57 = arith.constant 0 : index
      %109 = vector.load %arg4[%c0_55, %c0_56, %c0_57] : memref<4x128x128xf32, #tpu.memory_space<vmem>>, vector<1x128x128xf32>
      %110 = vector.shape_cast %109 : vector<1x128x128xf32> to vector<128x128xf32>
      %cst_58 = arith.constant dense<0.000000e+00> : vector<8x128xf32>
      %111 = tpu.matmul %108, %110, %cst_58 {dimension_numbers = #tpu.dot_dimension_numbers<[1], [0], [0], [1], [0, 0, 1, 1], [], []>} : vector<8x128xf32>, vector<128x128xf32>, vector<8x128xf32> -> vector<8x128xf32>
      %112 = vector.extract_strided_slice %0 {offsets = [0, 0], sizes = [1, 128], strides = [1, 1]} : vector<8x128xf32> to vector<1x128xf32>
      %113 = vector.broadcast %112 : vector<1x128xf32> to vector<8x128xf32>
      %114 = arith.addf %111, %113 : vector<8x128xf32>
      %cst_59 = arith.constant 0.000000e+00 : f32
      %115 = vector.broadcast %cst_59 : f32 to vector<8x128xf32>
      %116 = arith.cmpf oge, %114, %115 : vector<8x128xf32>
      %cst_60 = arith.constant 1.000000e-01 : f32
      %117 = vector.broadcast %cst_60 : f32 to vector<8x128xf32>
      %118 = arith.mulf %117, %114 : vector<8x128xf32>
      %119 = arith.select %116, %114, %118 : vector<8x128xi1>, vector<8x128xf32>
      %c1_61 = arith.constant 1 : index
      %c0_62 = arith.constant 0 : index
      %c0_63 = arith.constant 0 : index
      %120 = vector.load %arg4[%c1_61, %c0_62, %c0_63] : memref<4x128x128xf32, #tpu.memory_space<vmem>>, vector<1x128x128xf32>
      %121 = vector.shape_cast %120 : vector<1x128x128xf32> to vector<128x128xf32>
      %cst_64 = arith.constant dense<0.000000e+00> : vector<8x128xf32>
      %122 = tpu.matmul %119, %121, %cst_64 {dimension_numbers = #tpu.dot_dimension_numbers<[1], [0], [0], [1], [0, 0, 1, 1], [], []>} : vector<8x128xf32>, vector<128x128xf32>, vector<8x128xf32> -> vector<8x128xf32>
      %123 = vector.extract_strided_slice %0 {offsets = [1, 0], sizes = [1, 128], strides = [1, 1]} : vector<8x128xf32> to vector<1x128xf32>
      %124 = vector.broadcast %123 : vector<1x128xf32> to vector<8x128xf32>
      %125 = arith.addf %122, %124 : vector<8x128xf32>
      %cst_65 = arith.constant 0.000000e+00 : f32
      %126 = vector.broadcast %cst_65 : f32 to vector<8x128xf32>
      %127 = arith.cmpf oge, %125, %126 : vector<8x128xf32>
      %cst_66 = arith.constant 1.000000e-01 : f32
      %128 = vector.broadcast %cst_66 : f32 to vector<8x128xf32>
      %129 = arith.mulf %128, %125 : vector<8x128xf32>
      %130 = arith.select %127, %125, %129 : vector<8x128xi1>, vector<8x128xf32>
      %c2_67 = arith.constant 2 : index
      %c0_68 = arith.constant 0 : index
      %c0_69 = arith.constant 0 : index
      %131 = vector.load %arg4[%c2_67, %c0_68, %c0_69] : memref<4x128x128xf32, #tpu.memory_space<vmem>>, vector<1x128x128xf32>
      %132 = vector.shape_cast %131 : vector<1x128x128xf32> to vector<128x128xf32>
      %cst_70 = arith.constant dense<0.000000e+00> : vector<8x128xf32>
      %133 = tpu.matmul %130, %132, %cst_70 {dimension_numbers = #tpu.dot_dimension_numbers<[1], [0], [0], [1], [0, 0, 1, 1], [], []>} : vector<8x128xf32>, vector<128x128xf32>, vector<8x128xf32> -> vector<8x128xf32>
      %134 = vector.extract_strided_slice %0 {offsets = [2, 0], sizes = [1, 128], strides = [1, 1]} : vector<8x128xf32> to vector<1x128xf32>
      %135 = vector.broadcast %134 : vector<1x128xf32> to vector<8x128xf32>
      %136 = arith.addf %133, %135 : vector<8x128xf32>
      %cst_71 = arith.constant 0.000000e+00 : f32
      %137 = vector.broadcast %cst_71 : f32 to vector<8x128xf32>
      %138 = arith.cmpf oge, %136, %137 : vector<8x128xf32>
      %cst_72 = arith.constant 1.000000e-01 : f32
      %139 = vector.broadcast %cst_72 : f32 to vector<8x128xf32>
      %140 = arith.mulf %139, %136 : vector<8x128xf32>
      %141 = arith.select %138, %136, %140 : vector<8x128xi1>, vector<8x128xf32>
      %c0_73 = arith.constant 0 : index
      %c0_74 = arith.constant 0 : index
      %142 = vector.load %arg8[%c0_73, %c0_74] : memref<8x128xf32, #tpu.memory_space<vmem>>, vector<8x128xf32>
      tpu.vector_store %arg8[%c0_73, %c0_74], %141 {strides = array<i32>} : memref<8x128xf32, #tpu.memory_space<vmem>>, vector<8x128xf32>,
    } else {
    }
    %c0_2 = arith.constant 0 : index
    %c0_3 = arith.constant 0 : index
    %c0_4 = arith.constant 0 : index
    %7 = vector.load %arg3[%c0_2, %c0_3, %c0_4] : memref<8x8x128xf32, #tpu.memory_space<vmem>>, vector<8x8x128xf32>
    %8 = vector.shape_cast %7 : vector<8x8x128xf32> to vector<64x128xf32>
    %c3 = arith.constant 3 : index
    %c0_5 = arith.constant 0 : index
    %c0_6 = arith.constant 0 : index
    %9 = vector.load %arg4[%c3, %c0_5, %c0_6] : memref<4x128x128xf32, #tpu.memory_space<vmem>>, vector<1x128x128xf32>
    %10 = vector.shape_cast %9 : vector<1x128x128xf32> to vector<128x128xf32>
    %cst = arith.constant dense<0.000000e+00> : vector<64x128xf32>
    %11 = tpu.matmul %8, %10, %cst {dimension_numbers = #tpu.dot_dimension_numbers<[1], [0], [0], [1], [0, 0, 1, 1], [], []>} : vector<64x128xf32>, vector<128x128xf32>, vector<64x128xf32> -> vector<64x128xf32>
    %12 = vector.shape_cast %11 : vector<64x128xf32> to vector<8x8x128xf32>
    %c0_7 = arith.constant 0 : index
    %c0_8 = arith.constant 0 : index
    %13 = vector.load %arg8[%c0_7, %c0_8] : memref<8x128xf32, #tpu.memory_space<vmem>>, vector<8x128xf32>
    %14 = arith.mulf %13, %3 : vector<8x128xf32>
    %15 = vector.extract_strided_slice %12 {offsets = [0, 0, 0], sizes = [1, 8, 128], strides = [1, 1, 1]} : vector<8x8x128xf32> to vector<1x8x128xf32>
    %16 = vector.shape_cast %15 : vector<1x8x128xf32> to vector<8x128xf32>
    %17 = arith.addf %14, %16 : vector<8x128xf32>
    %c0_9 = arith.constant 0 : index
    %c0_10 = arith.constant 0 : index
    %c0_11 = arith.constant 0 : index
    %18 = vector.load %arg9[%c0_9, %c0_10, %c0_11] : memref<8x8x128xf32, #tpu.memory_space<vmem>>, vector<1x8x128xf32>
    %19 = vector.shape_cast %18 : vector<1x8x128xf32> to vector<8x128xf32>
    %20 = vector.shape_cast %17 : vector<8x128xf32> to vector<1x8x128xf32>
    tpu.vector_store %arg9[%c0_9, %c0_10, %c0_11], %20 {strides = array<i32>} : memref<8x8x128xf32, #tpu.memory_space<vmem>>, vector<1x8x128xf32>,
    %21 = arith.mulf %17, %3 : vector<8x128xf32>
    %22 = vector.extract_strided_slice %12 {offsets = [1, 0, 0], sizes = [1, 8, 128], strides = [1, 1, 1]} : vector<8x8x128xf32> to vector<1x8x128xf32>
    %23 = vector.shape_cast %22 : vector<1x8x128xf32> to vector<8x128xf32>
    %24 = arith.addf %21, %23 : vector<8x128xf32>
    %c1 = arith.constant 1 : index
    %c0_12 = arith.constant 0 : index
    %c0_13 = arith.constant 0 : index
    %25 = vector.load %arg9[%c1, %c0_12, %c0_13] : memref<8x8x128xf32, #tpu.memory_space<vmem>>, vector<1x8x128xf32>
    %26 = vector.shape_cast %25 : vector<1x8x128xf32> to vector<8x128xf32>
    %27 = vector.shape_cast %24 : vector<8x128xf32> to vector<1x8x128xf32>
    tpu.vector_store %arg9[%c1, %c0_12, %c0_13], %27 {strides = array<i32>} : memref<8x8x128xf32, #tpu.memory_space<vmem>>, vector<1x8x128xf32>,
    %28 = arith.mulf %24, %3 : vector<8x128xf32>
    %29 = vector.extract_strided_slice %12 {offsets = [2, 0, 0], sizes = [1, 8, 128], strides = [1, 1, 1]} : vector<8x8x128xf32> to vector<1x8x128xf32>
    %30 = vector.shape_cast %29 : vector<1x8x128xf32> to vector<8x128xf32>
    %31 = arith.addf %28, %30 : vector<8x128xf32>
    %c2 = arith.constant 2 : index
    %c0_14 = arith.constant 0 : index
    %c0_15 = arith.constant 0 : index
    %32 = vector.load %arg9[%c2, %c0_14, %c0_15] : memref<8x8x128xf32, #tpu.memory_space<vmem>>, vector<1x8x128xf32>
    %33 = vector.shape_cast %32 : vector<1x8x128xf32> to vector<8x128xf32>
    %34 = vector.shape_cast %31 : vector<8x128xf32> to vector<1x8x128xf32>
    tpu.vector_store %arg9[%c2, %c0_14, %c0_15], %34 {strides = array<i32>} : memref<8x8x128xf32, #tpu.memory_space<vmem>>, vector<1x8x128xf32>,
    %35 = arith.mulf %31, %3 : vector<8x128xf32>
    %36 = vector.extract_strided_slice %12 {offsets = [3, 0, 0], sizes = [1, 8, 128], strides = [1, 1, 1]} : vector<8x8x128xf32> to vector<1x8x128xf32>
    %37 = vector.shape_cast %36 : vector<1x8x128xf32> to vector<8x128xf32>
    %38 = arith.addf %35, %37 : vector<8x128xf32>
    %c3_16 = arith.constant 3 : index
    %c0_17 = arith.constant 0 : index
    %c0_18 = arith.constant 0 : index
    %39 = vector.load %arg9[%c3_16, %c0_17, %c0_18] : memref<8x8x128xf32, #tpu.memory_space<vmem>>, vector<1x8x128xf32>
    %40 = vector.shape_cast %39 : vector<1x8x128xf32> to vector<8x128xf32>
    %41 = vector.shape_cast %38 : vector<8x128xf32> to vector<1x8x128xf32>
    tpu.vector_store %arg9[%c3_16, %c0_17, %c0_18], %41 {strides = array<i32>} : memref<8x8x128xf32, #tpu.memory_space<vmem>>, vector<1x8x128xf32>,
    %42 = arith.mulf %38, %3 : vector<8x128xf32>
    %43 = vector.extract_strided_slice %12 {offsets = [4, 0, 0], sizes = [1, 8, 128], strides = [1, 1, 1]} : vector<8x8x128xf32> to vector<1x8x128xf32>
    %44 = vector.shape_cast %43 : vector<1x8x128xf32> to vector<8x128xf32>
    %45 = arith.addf %42, %44 : vector<8x128xf32>
    %c4 = arith.constant 4 : index
    %c0_19 = arith.constant 0 : index
    %c0_20 = arith.constant 0 : index
    %46 = vector.load %arg9[%c4, %c0_19, %c0_20] : memref<8x8x128xf32, #tpu.memory_space<vmem>>, vector<1x8x128xf32>
    %47 = vector.shape_cast %46 : vector<1x8x128xf32> to vector<8x128xf32>
    %48 = vector.shape_cast %45 : vector<8x128xf32> to vector<1x8x128xf32>
    tpu.vector_store %arg9[%c4, %c0_19, %c0_20], %48 {strides = array<i32>} : memref<8x8x128xf32, #tpu.memory_space<vmem>>, vector<1x8x128xf32>,
    %49 = arith.mulf %45, %3 : vector<8x128xf32>
    %50 = vector.extract_strided_slice %12 {offsets = [5, 0, 0], sizes = [1, 8, 128], strides = [1, 1, 1]} : vector<8x8x128xf32> to vector<1x8x128xf32>
    %51 = vector.shape_cast %50 : vector<1x8x128xf32> to vector<8x128xf32>
    %52 = arith.addf %49, %51 : vector<8x128xf32>
    %c5 = arith.constant 5 : index
    %c0_21 = arith.constant 0 : index
    %c0_22 = arith.constant 0 : index
    %53 = vector.load %arg9[%c5, %c0_21, %c0_22] : memref<8x8x128xf32, #tpu.memory_space<vmem>>, vector<1x8x128xf32>
    %54 = vector.shape_cast %53 : vector<1x8x128xf32> to vector<8x128xf32>
    %55 = vector.shape_cast %52 : vector<8x128xf32> to vector<1x8x128xf32>
    tpu.vector_store %arg9[%c5, %c0_21, %c0_22], %55 {strides = array<i32>} : memref<8x8x128xf32, #tpu.memory_space<vmem>>, vector<1x8x128xf32>,
    %56 = arith.mulf %52, %3 : vector<8x128xf32>
    %57 = vector.extract_strided_slice %12 {offsets = [6, 0, 0], sizes = [1, 8, 128], strides = [1, 1, 1]} : vector<8x8x128xf32> to vector<1x8x128xf32>
    %58 = vector.shape_cast %57 : vector<1x8x128xf32> to vector<8x128xf32>
    %59 = arith.addf %56, %58 : vector<8x128xf32>
    %c6 = arith.constant 6 : index
    %c0_23 = arith.constant 0 : index
    %c0_24 = arith.constant 0 : index
    %60 = vector.load %arg9[%c6, %c0_23, %c0_24] : memref<8x8x128xf32, #tpu.memory_space<vmem>>, vector<1x8x128xf32>
    %61 = vector.shape_cast %60 : vector<1x8x128xf32> to vector<8x128xf32>
    %62 = vector.shape_cast %59 : vector<8x128xf32> to vector<1x8x128xf32>
    tpu.vector_store %arg9[%c6, %c0_23, %c0_24], %62 {strides = array<i32>} : memref<8x8x128xf32, #tpu.memory_space<vmem>>, vector<1x8x128xf32>,
    %63 = arith.mulf %59, %3 : vector<8x128xf32>
    %64 = vector.extract_strided_slice %12 {offsets = [7, 0, 0], sizes = [1, 8, 128], strides = [1, 1, 1]} : vector<8x8x128xf32> to vector<1x8x128xf32>
    %65 = vector.shape_cast %64 : vector<1x8x128xf32> to vector<8x128xf32>
    %66 = arith.addf %63, %65 : vector<8x128xf32>
    %c7 = arith.constant 7 : index
    %c0_25 = arith.constant 0 : index
    %c0_26 = arith.constant 0 : index
    %67 = vector.load %arg9[%c7, %c0_25, %c0_26] : memref<8x8x128xf32, #tpu.memory_space<vmem>>, vector<1x8x128xf32>
    %68 = vector.shape_cast %67 : vector<1x8x128xf32> to vector<8x128xf32>
    %69 = vector.shape_cast %66 : vector<8x128xf32> to vector<1x8x128xf32>
    tpu.vector_store %arg9[%c7, %c0_25, %c0_26], %69 {strides = array<i32>} : memref<8x8x128xf32, #tpu.memory_space<vmem>>, vector<1x8x128xf32>,
    %c0_27 = arith.constant 0 : index
    %c0_28 = arith.constant 0 : index
    %70 = vector.load %arg8[%c0_27, %c0_28] : memref<8x128xf32, #tpu.memory_space<vmem>>, vector<8x128xf32>
    tpu.vector_store %arg8[%c0_27, %c0_28], %66 {strides = array<i32>} : memref<8x128xf32, #tpu.memory_space<vmem>>, vector<8x128xf32>,
    %c0_29 = arith.constant 0 : index
    %c0_30 = arith.constant 0 : index
    %c0_31 = arith.constant 0 : index
    %71 = vector.load %arg9[%c0_29, %c0_30, %c0_31] : memref<8x8x128xf32, #tpu.memory_space<vmem>>, vector<8x8x128xf32>
    %72 = vector.shape_cast %71 : vector<8x8x128xf32> to vector<64x128xf32>
    %cst_32 = arith.constant 0.000000e+00 : f32
    %73 = vector.broadcast %cst_32 : f32 to vector<64x128xf32>
    %74 = arith.cmpf olt, %72, %73 : vector<64x128xf32>
    %cst_33 = arith.constant 1.000000e+01 : f32
    %75 = vector.broadcast %cst_33 : f32 to vector<64x128xf32>
    %76 = arith.mulf %72, %75 : vector<64x128xf32>
    %77 = arith.select %74, %76, %72 : vector<64x128xi1>, vector<64x128xf32>
    %78 = vector.extract_strided_slice %0 {offsets = [2, 0], sizes = [1, 128], strides = [1, 1]} : vector<8x128xf32> to vector<1x128xf32>
    %79 = vector.broadcast %78 : vector<1x128xf32> to vector<64x128xf32>
    %80 = arith.subf %77, %79 : vector<64x128xf32>
    %c0_34 = arith.constant 0 : index
    %c0_35 = arith.constant 0 : index
    %c0_36 = arith.constant 0 : index
    %81 = vector.load %arg5[%c0_34, %c0_35, %c0_36] : memref<3x128x128xf32, #tpu.memory_space<vmem>>, vector<1x128x128xf32>
    %82 = vector.shape_cast %81 : vector<1x128x128xf32> to vector<128x128xf32>
    %cst_37 = arith.constant dense<0.000000e+00> : vector<64x128xf32>
    %83 = tpu.matmul %80, %82, %cst_37 {dimension_numbers = #tpu.dot_dimension_numbers<[1], [0], [0], [1], [0, 0, 1, 1], [], []>} : vector<64x128xf32>, vector<128x128xf32>, vector<64x128xf32> -> vector<64x128xf32>
    %cst_38 = arith.constant 0.000000e+00 : f32
    %84 = vector.broadcast %cst_38 : f32 to vector<64x128xf32>
    %85 = arith.cmpf olt, %83, %84 : vector<64x128xf32>
    %cst_39 = arith.constant 1.000000e+01 : f32
    %86 = vector.broadcast %cst_39 : f32 to vector<64x128xf32>
    %87 = arith.mulf %83, %86 : vector<64x128xf32>
    %88 = arith.select %85, %87, %83 : vector<64x128xi1>, vector<64x128xf32>
    %89 = vector.extract_strided_slice %0 {offsets = [1, 0], sizes = [1, 128], strides = [1, 1]} : vector<8x128xf32> to vector<1x128xf32>
    %90 = vector.broadcast %89 : vector<1x128xf32> to vector<64x128xf32>
    %91 = arith.subf %88, %90 : vector<64x128xf32>
    %c1_40 = arith.constant 1 : index
    %c0_41 = arith.constant 0 : index
    %c0_42 = arith.constant 0 : index
    %92 = vector.load %arg5[%c1_40, %c0_41, %c0_42] : memref<3x128x128xf32, #tpu.memory_space<vmem>>, vector<1x128x128xf32>
    %93 = vector.shape_cast %92 : vector<1x128x128xf32> to vector<128x128xf32>
    %cst_43 = arith.constant dense<0.000000e+00> : vector<64x128xf32>
    %94 = tpu.matmul %91, %93, %cst_43 {dimension_numbers = #tpu.dot_dimension_numbers<[1], [0], [0], [1], [0, 0, 1, 1], [], []>} : vector<64x128xf32>, vector<128x128xf32>, vector<64x128xf32> -> vector<64x128xf32>
    %cst_44 = arith.constant 0.000000e+00 : f32
    %95 = vector.broadcast %cst_44 : f32 to vector<64x128xf32>
    %96 = arith.cmpf olt, %94, %95 : vector<64x128xf32>
    %cst_45 = arith.constant 1.000000e+01 : f32
    %97 = vector.broadcast %cst_45 : f32 to vector<64x128xf32>
    %98 = arith.mulf %94, %97 : vector<64x128xf32>
    %99 = arith.select %96, %98, %94 : vector<64x128xi1>, vector<64x128xf32>
    %100 = vector.extract_strided_slice %0 {offsets = [0, 0], sizes = [1, 128], strides = [1, 1]} : vector<8x128xf32> to vector<1x128xf32>
    %101 = vector.broadcast %100 : vector<1x128xf32> to vector<64x128xf32>
    %102 = arith.subf %99, %101 : vector<64x128xf32>
    %c2_46 = arith.constant 2 : index
    %c0_47 = arith.constant 0 : index
    %c0_48 = arith.constant 0 : index
    %103 = vector.load %arg5[%c2_46, %c0_47, %c0_48] : memref<3x128x128xf32, #tpu.memory_space<vmem>>, vector<1x128x128xf32>
    %104 = vector.shape_cast %103 : vector<1x128x128xf32> to vector<128x128xf32>
    %cst_49 = arith.constant dense<0.000000e+00> : vector<64x128xf32>
    %105 = tpu.matmul %102, %104, %cst_49 {dimension_numbers = #tpu.dot_dimension_numbers<[1], [0], [0], [1], [0, 0, 1, 1], [], []>} : vector<64x128xf32>, vector<128x128xf32>, vector<64x128xf32> -> vector<64x128xf32>
    %106 = vector.shape_cast %105 : vector<64x128xf32> to vector<8x8x128xf32>
    %c0_50 = arith.constant 0 : index
    %c0_51 = arith.constant 0 : index
    %c0_52 = arith.constant 0 : index
    %107 = vector.load %arg7[%c0_50, %c0_51, %c0_52] : memref<8x8x128xf32, #tpu.memory_space<vmem>>, vector<8x8x128xf32>
    tpu.vector_store %arg7[%c0_50, %c0_51, %c0_52], %106 {strides = array<i32>} : memref<8x8x128xf32, #tpu.memory_space<vmem>>, vector<8x8x128xf32>,
    return
  }
  func.func @transform_0(%arg0: i32, %arg1: i32) -> (i32, i32) {
    %c0_i32 = arith.constant 0 : i32
    %c0_i32_0 = arith.constant 0 : i32
    return %arg0, %c0_i32 : i32, i32
  }
  func.func @transform_1(%arg0: i32, %arg1: i32) -> (i32, i32, i32) {
    %c0_i32 = arith.constant 0 : i32
    %c0_i32_0 = arith.constant 0 : i32
    return %arg1, %arg0, %c0_i32 : i32, i32, i32
  }
  func.func @transform_2(%arg0: i32, %arg1: i32) -> (i32, i32, i32) {
    %c0_i32 = arith.constant 0 : i32
    %c0_i32_0 = arith.constant 0 : i32
    %c0_i32_1 = arith.constant 0 : i32
    %c0_i32_2 = arith.constant 0 : i32
    return %c0_i32, %c0_i32_0, %c0_i32_1 : i32, i32, i32
  }
  func.func @transform_3(%arg0: i32, %arg1: i32) -> (i32, i32, i32) {
    %c0_i32 = arith.constant 0 : i32
    %c0_i32_0 = arith.constant 0 : i32
    %c0_i32_1 = arith.constant 0 : i32
    %c0_i32_2 = arith.constant 0 : i32
    return %c0_i32, %c0_i32_0, %c0_i32_1 : i32, i32, i32
  }
  func.func @transform_4(%arg0: i32, %arg1: i32) -> (i32, i32) {
    %c0_i32 = arith.constant 0 : i32
    %c0_i32_0 = arith.constant 0 : i32
    %c0_i32_1 = arith.constant 0 : i32
    return %c0_i32, %c0_i32_0 : i32, i32
  }
  func.func @transform_5(%arg0: i32, %arg1: i32) -> (i32, i32, i32) {
    %c0_i32 = arith.constant 0 : i32
    %c0_i32_0 = arith.constant 0 : i32
    return %arg1, %arg0, %c0_i32 : i32, i32, i32
  }
}

</mosaic_0001>

<llo_original>
// kernel: tpu_custom_call.1
$region0: #{tpu_custom_call.1}
  #allocation0 [shape = 'u32[]', space=smem, size = 0x4, offset = 0x4, fixed_abs, tag = 'smem constant byte address 0x4 - core index']
  #allocation1 [shape = 'u32[72,128]{1,0:T(1,128)}', space=vmem, size = 0x9000, scoped, tag = 'internal scratch']
  #allocation2 [shape = 'f32[8,128]{1,0:T(8,128)}', space=vmem, size = 0x1000, scoped, tag = 'scratch operand']
  #allocation3 [shape = 'f32[8,8,128]{2,1,0:T(8,128)}', space=vmem, size = 0x8000, scoped, tag = 'scratch operand']
  %s0 = inlined_call_operand.hbm [shape: f32[16,128], index: 0, kind: input, shape index: {}]
  %s1 = inlined_call_operand.hbm [shape: f32[8,16,128], index: 1, kind: input, shape index: {}]
  %s2 = inlined_call_operand.hbm [shape: f32[4,128,128], index: 2, kind: input, shape index: {}]
  %s3 = inlined_call_operand.hbm [shape: f32[3,128,128], index: 3, kind: input, shape index: {}]
  %s4 = inlined_call_operand.hbm [shape: f32[8,128], index: 4, kind: input, shape index: {}]
  %s5 = inlined_call_operand.hbm [shape: f32[8,16,128], index: 5, kind: output, shape index: {}]
  %s6 = sld [smem:[#allocation0]]
  $region77: #{tpu_custom_call.1} parent=0
    _
  %s8 = ssub.s32 1, %s6
  %s9 = scalar_select 0, %s8, %s6
  $region1: #{tpu_custom_call.1} parent=0
    #allocation4 [shape = 'u8[8192]{0}', space=vmem, size = 0x2000, scoped, tag = 'input window, operand 0']
    #allocation5 [shape = 's32[2]{0}', space=sflag, size = 0x8, scoped, tag = 'scoped memory for tpu_custom_call.1']
    #allocation6 [shape = 's32[2]{0}', space=sflag, size = 0x8, scoped, tag = 'scoped memory for tpu_custom_call.1']
    #allocation7 [shape = 'u8[65536]{0}', space=vmem, size = 0x10000, scoped, tag = 'input window, operand 1']
    #allocation8 [shape = 's32[2]{0}', space=sflag, size = 0x8, scoped, tag = 'scoped memory for tpu_custom_call.1']
    #allocation9 [shape = 'u8[262144]{0}', space=vmem, size = 0x40000, scoped, tag = 'input window, operand 2, single buffered']
    #allocation10 [shape = 'u8[196608]{0}', space=vmem, size = 0x30000, scoped, tag = 'input window, operand 3, single buffered']
    #allocation11 [shape = 's32[1]{0}', space=sflag, size = 0x4, scoped, tag = 'scoped memory for tpu_custom_call.1']
    #allocation12 [shape = 'u8[4096]{0}', space=vmem, size = 0x1000, scoped, tag = 'input window, operand 4, single buffered']
    #allocation13 [shape = 'u8[65536]{0}', space=vmem, size = 0x10000, scoped, tag = 'output window, operand 0']
    %10 = vsyncpa [#allocation5], 0
    %s11 = scalar_lea.sflag [#allocation5], 1
    %12 = vsyncpa %s11, 0
    %13 = vsyncpa [#allocation8], 0
    %s14 = scalar_lea.sflag [#allocation8], 1
    %15 = vsyncpa %s14, 0
    %16 = vsyncpa [#allocation11], 0
    %17 = vsyncpa [#allocation6], 0
    %s18 = scalar_lea.sflag [#allocation6], 1
    %19 = vsyncpa %s18, 0
    loop: start=0, step=1, limit=4
    $region2: #{tpu_custom_call.1} parent=1 // loop_pre_header
      _
    $region3: #{tpu_custom_call.1} parent=1 // loop_header
      %s21 = sphi 0, %s25
      %p22 = scmp.ge.s32.totalorder %s21, 4
      %s28 = sphi 0, %s40
      %s29 = sphi 0, %s36
      %s30 = sphi 0, %s28
      %s31 = sphi 0, %s29
      %s32 = sphi 0, %s30
      %s33 = sphi 0, %s31
      %s43 = sphi 0, %s45
      %s46 = sphi 0, %s43
      %s47 = sphi 0, %s46
      %s63 = sphi 0, %s47
      %s71 = sphi 0, %s73
      %s74 = sphi 0, %s71
      %s75 = sphi 0, %s74
      %s91 = sphi 0, %s75
      %s95 = sphi 0, %s95
      %s97 = sphi 0, %s95
      %s98 = sphi 0, %s97
      %s112 = sphi 0, %s98
      %s116 = sphi 0, %s116
      %s118 = sphi 0, %s116
      %s119 = sphi 0, %s118
      %s133 = sphi 0, %s119
      %s137 = sphi 0, %s137
      %s139 = sphi 0, %s137
      %s140 = sphi 0, %s139
      %s154 = sphi 0, %s140
      %s162 = sphi 0, %s164
      %s165 = sphi 0, %s162
      %s166 = sphi 0, %s165
      %s182 = sphi 0, %s166
    $region4: #{tpu_custom_call.1} parent=1 // loop_header_branch
      %24 = sbr.rel (%p22) target = $region8
    $region5: #{tpu_custom_call.1} parent=1 // loop_body
      %s26 = ssub.s32 %s21, 1
      %s27 = ssub.s32 %s21, 2
      %s34 = sadd.s32 1, %s29
      %p35 = scmp.ge.s32.totalorder %s34, 1
      %s36 = scalar_select %p35, 0, %s34
      %s37 = sadd.s32 1, %s28
      %s38 = scalar_select %p35, %s37, %s28
      %p39 = scmp.ge.s32.totalorder %s38, 2
      %s40 = scalar_select %p39, 0, %s38
      %s41 = ssub.s32 %s28, %s40
      %p42 = scmp.eq.s32.totalorder %s41, 0
      %s44 = sadd.s32 %s43, 1
      %s45 = scalar_select %p42, %s43, %s44
      %p48 = pneg %p42
      %p49 = scmp.eq.s32.totalorder %s21, 1
      %p50 = por %p48, %p49
      %p51 = scmp.ne.s32.totalorder %s43, %s46
      %p52 = scmp.eq.s32.totalorder %s21, 0
      %p53 = por %p51, %p52
      %p54 = scmp.ne.s32.totalorder %s43, %s46
      %p55 = scmp.eq.s32.totalorder %s26, 1
      %p56 = por %p54, %p55
      %p57 = scmp.ne.s32.totalorder %s46, %s47
      %p58 = scmp.eq.s32.totalorder %s26, 0
      %p59 = por %p57, %p58
      %p60 = scmp.ne.s32.totalorder %s46, %s47
      %p61 = scmp.eq.s32.totalorder %s27, 1
      %p62 = por %p60, %p61
      %p64 = scmp.ne.s32.totalorder %s47, %s63
      %p65 = scmp.eq.s32.totalorder %s27, 0
      %p66 = por %p64, %p65
      %s67 = ssub.s32 %s29, %s36
      %s68 = ssub.s32 %s28, %s40
      %s69 = sor.u32 %s67, %s68
      %p70 = scmp.eq.s32.totalorder %s69, 0
      %s72 = sadd.s32 %s71, 1
      %s73 = scalar_select %p70, %s71, %s72
      %p76 = pneg %p70
      %p77 = scmp.eq.s32.totalorder %s21, 1
      %p78 = por %p76, %p77
      %p79 = scmp.ne.s32.totalorder %s71, %s74
      %p80 = scmp.eq.s32.totalorder %s21, 0
      %p81 = por %p79, %p80
      %p82 = scmp.ne.s32.totalorder %s71, %s74
      %p83 = scmp.eq.s32.totalorder %s26, 1
      %p84 = por %p82, %p83
      %p85 = scmp.ne.s32.totalorder %s74, %s75
      %p86 = scmp.eq.s32.totalorder %s26, 0
      %p87 = por %p85, %p86
      %p88 = scmp.ne.s32.totalorder %s74, %s75
      %p89 = scmp.eq.s32.totalorder %s27, 1
      %p90 = por %p88, %p89
      %p92 = scmp.ne.s32.totalorder %s75, %s91
      %p93 = scmp.eq.s32.totalorder %s27, 0
      %p94 = por %p92, %p93
      %s96 = sadd.s32 %s95, 1
      %p99 = scmp.eq.s32.totalorder %s21, 1
      %p100 = scmp.ne.s32.totalorder %s95, %s97
      %p101 = scmp.eq.s32.totalorder %s21, 0
      %p102 = por %p100, %p101
      %p103 = scmp.ne.s32.totalorder %s95, %s97
      %p104 = scmp.eq.s32.totalorder %s26, 1
      %p105 = por %p103, %p104
      %p106 = scmp.ne.s32.totalorder %s97, %s98
      %p107 = scmp.eq.s32.totalorder %s26, 0
      %p108 = por %p106, %p107
      %p109 = scmp.ne.s32.totalorder %s97, %s98
      %p110 = scmp.eq.s32.totalorder %s27, 1
      %p111 = por %p109, %p110
      %p113 = scmp.ne.s32.totalorder %s98, %s112
      %p114 = scmp.eq.s32.totalorder %s27, 0
      %p115 = por %p113, %p114
      %s117 = sadd.s32 %s116, 1
      %p120 = scmp.eq.s32.totalorder %s21, 1
      %p121 = scmp.ne.s32.totalorder %s116, %s118
      %p122 = scmp.eq.s32.totalorder %s21, 0
      %p123 = por %p121, %p122
      %p124 = scmp.ne.s32.totalorder %s116, %s118
      %p125 = scmp.eq.s32.totalorder %s26, 1
      %p126 = por %p124, %p125
      %p127 = scmp.ne.s32.totalorder %s118, %s119
      %p128 = scmp.eq.s32.totalorder %s26, 0
      %p129 = por %p127, %p128
      %p130 = scmp.ne.s32.totalorder %s118, %s119
      %p131 = scmp.eq.s32.totalorder %s27, 1
      %p132 = por %p130, %p131
      %p134 = scmp.ne.s32.totalorder %s119, %s133
      %p135 = scmp.eq.s32.totalorder %s27, 0
      %p136 = por %p134, %p135
      %s138 = sadd.s32 %s137, 1
      %p141 = scmp.eq.s32.totalorder %s21, 1
      %p142 = scmp.ne.s32.totalorder %s137, %s139
      %p143 = scmp.eq.s32.totalorder %s21, 0
      %p144 = por %p142, %p143
      %p145 = scmp.ne.s32.totalorder %s137, %s139
      %p146 = scmp.eq.s32.totalorder %s26, 1
      %p147 = por %p145, %p146
      %p148 = scmp.ne.s32.totalorder %s139, %s140
      %p149 = scmp.eq.s32.totalorder %s26, 0
      %p150 = por %p148, %p149
      %p151 = scmp.ne.s32.totalorder %s139, %s140
      %p152 = scmp.eq.s32.totalorder %s27, 1
      %p153 = por %p151, %p152
      %p155 = scmp.ne.s32.totalorder %s140, %s154
      %p156 = scmp.eq.s32.totalorder %s27, 0
      %p157 = por %p155, %p156
      %s158 = ssub.s32 %s29, %s36
      %s159 = ssub.s32 %s28, %s40
      %s160 = sor.u32 %s158, %s159
      %p161 = scmp.eq.s32.totalorder %s160, 0
      %s163 = sadd.s32 %s162, 1
      %s164 = scalar_select %p161, %s162, %s163
      %p167 = pneg %p161
      %p168 = scmp.eq.s32.totalorder %s21, 1
      %p169 = por %p167, %p168
      %p170 = scmp.ne.s32.totalorder %s162, %s165
      %p171 = scmp.eq.s32.totalorder %s21, 0
      %p172 = por %p170, %p171
      %p173 = scmp.ne.s32.totalorder %s162, %s165
      %p174 = scmp.eq.s32.totalorder %s26, 1
      %p175 = por %p173, %p174
      %p176 = scmp.ne.s32.totalorder %s165, %s166
      %p177 = scmp.eq.s32.totalorder %s26, 0
      %p178 = por %p176, %p177
      %p179 = scmp.ne.s32.totalorder %s165, %s166
      %p180 = scmp.eq.s32.totalorder %s27, 1
      %p181 = por %p179, %p180
      %p183 = scmp.ne.s32.totalorder %s166, %s182
      %p184 = scmp.eq.s32.totalorder %s27, 0
      %p185 = por %p183, %p184
      %p186 = scmp.le.s32.totalorder 1, %s21
      %p187 = scmp.lt.s32.totalorder %s21, 3
      %p188 = pnand %p186, %p187
      %p189 = pneg %p188
      // Predicated region
      $region9: #{tpu_custom_call.1} parent=5 // pred_check
        _
      $region10: #{tpu_custom_call.1} parent=5 // pred_check_branch
        %191 = sbr.rel (%p188) target = $region12
      $region11: #{tpu_custom_call.1} parent=5 // pred_region
        %s192 = ssub.s32 %s21, 1
        // Predicated region
        $region13: #{tpu_custom_call.1} parent=11 // pred_check
          %p193 = pneg %p108
        $region14: #{tpu_custom_call.1} parent=11 // pred_check_branch
          %195 = sbr.rel (%p193) target = $region16
        $region15: #{tpu_custom_call.1} parent=11 // pred_region
          %197 = vsyncadd [#allocation8], 0
          %s198 = sshll.u32 %s2, 4
          %s199 = int_to_ptr.hbm [resolvable:$true] %s198
          %s200 = sshll.u32 [#allocation9], 4
          %s201 = int_to_ptr.vmem [resolvable:$true] %s200
          %206 = dma.hbm_to_vmem [thread:$0]  %s199, 8192, %s201, [#allocation8], 128, 128, 8
        $region16: #{tpu_custom_call.1} parent=11 // pred_fallthru
          _
        // Predicated region
        $region17: #{tpu_custom_call.1} parent=11 // pred_check
          %p207 = pneg %p129
        $region18: #{tpu_custom_call.1} parent=11 // pred_check_branch
          %209 = sbr.rel (%p207) target = $region20
        $region19: #{tpu_custom_call.1} parent=11 // pred_region
          %211 = vsyncadd [#allocation11], 0
          %s212 = sshll.u32 %s3, 4
          %s213 = int_to_ptr.hbm [resolvable:$true] %s212
          %s214 = sshll.u32 [#allocation10], 4
          %s215 = int_to_ptr.vmem [resolvable:$true] %s214
          %220 = dma.hbm_to_vmem [thread:$0]  %s213, 6144, %s215, [#allocation11], 128, 128, 8
        $region20: #{tpu_custom_call.1} parent=11 // pred_fallthru
          _
        // Predicated region
        $region21: #{tpu_custom_call.1} parent=11 // pred_check
          %p221 = pneg %p150
        $region22: #{tpu_custom_call.1} parent=11 // pred_check_branch
          %223 = sbr.rel (%p221) target = $region24
        $region23: #{tpu_custom_call.1} parent=11 // pred_region
          %225 = vsyncadd [#allocation11], 0
          %s227 = sshll.u32 %s4, 4
          %s228 = int_to_ptr.hbm [resolvable:$true] %s227
          %s229 = sshll.u32 [#allocation12], 4
          %s230 = int_to_ptr.vmem [resolvable:$true] %s229
          %232 = dma.hbm_to_vmem [thread:$0]  %s228, 128, %s230, [#allocation11]
        $region24: #{tpu_custom_call.1} parent=11 // pred_fallthru
          _
      $region12: #{tpu_custom_call.1} parent=5 // pred_fallthru
        _
      %p233 = scmp.lt.s32.totalorder %s21, 2
      // Predicated region
      $region25: #{tpu_custom_call.1} parent=5 // pred_check
        %p234 = pneg %p233
      $region26: #{tpu_custom_call.1} parent=5 // pred_check_branch
        %236 = sbr.rel (%p234) target = $region28
      $region27: #{tpu_custom_call.1} parent=5 // pred_region
        // Predicated region
        $region29: #{tpu_custom_call.1} parent=27 // pred_check
          %p237 = pneg %p53
        $region30: #{tpu_custom_call.1} parent=27 // pred_check_branch
          %239 = sbr.rel (%p237) target = $region32
        $region31: #{tpu_custom_call.1} parent=27 // pred_region
          %s240 = sand.u32 %s43, 1
          %s241 = scalar_lea.sflag [#allocation5], %s240
          %s242 = sand.u32 %s43, 1
          %s243 = smul.addr %s242, 8
          %s244 = scalar_lea.vmem [#allocation4], %s243
          %246 = vsyncadd %s241, 0
          %s247 = smul.addr %s28, 8
          %s248 = scalar_lea.hbm %s0, %s247
          %s250 = sshll.u32 %s248, 4
          %s251 = int_to_ptr.hbm [resolvable:$true] %s250
          %s252 = sshll.u32 %s244, 4
          %s253 = int_to_ptr.vmem [resolvable:$true] %s252
          %255 = dma.hbm_to_vmem [thread:$0]  %s251, 128, %s253, %s241
        $region32: #{tpu_custom_call.1} parent=27 // pred_fallthru
          _
        // Predicated region
        $region33: #{tpu_custom_call.1} parent=27 // pred_check
          %p256 = pneg %p81
        $region34: #{tpu_custom_call.1} parent=27 // pred_check_branch
          %258 = sbr.rel (%p256) target = $region36
        $region35: #{tpu_custom_call.1} parent=27 // pred_region
          %s259 = sand.u32 %s21, 1
          %s260 = scalar_lea.sflag [#allocation8], %s259
          %s261 = sand.u32 %s71, 1
          %s262 = smul.addr %s261, 64
          %s263 = scalar_lea.vmem [#allocation7], %s262
          %s264 = smul.u32 8, %s29
          %266 = vsyncadd %s260, 0
          %s267 = smul.addr %s264, 2
          %s268 = sadd.s32 %s28, %s267
          %s269 = smul.addr %s268, 8
          %s270 = scalar_lea.hbm %s1, %s269
          %s271 = sshll.u32 %s270, 4
          %s272 = int_to_ptr.hbm [resolvable:$true] %s271
          %s273 = sshll.u32 %s263, 4
          %s274 = int_to_ptr.vmem [resolvable:$true] %s273
          %279 = dma.hbm_to_vmem [thread:$0]  %s272, 1024, %s274, %s260, 256, 128, 8
        $region36: #{tpu_custom_call.1} parent=27 // pred_fallthru
          _
      $region28: #{tpu_custom_call.1} parent=5 // pred_fallthru
        _
      %p280 = scmp.le.s32.totalorder 1, %s21
      %p281 = scmp.lt.s32.totalorder %s21, 3
      %p282 = pnand %p280, %p281
      %p283 = pneg %p282
      // Predicated region
      $region37: #{tpu_custom_call.1} parent=5 // pred_check
        _
      $region38: #{tpu_custom_call.1} parent=5 // pred_check_branch
        %285 = sbr.rel (%p282) target = $region40
      $region39: #{tpu_custom_call.1} parent=5 // pred_region
        %s286 = ssub.s32 %s21, 1
        %s287 = sand.u32 %s46, 1
        %s288 = scalar_lea.sflag [#allocation5], %s287
        %s289 = sand.u32 %s46, 1
        %s290 = smul.addr %s289, 8
        %s291 = scalar_lea.vmem [#allocation4], %s290
        // Predicated region
        $region41: #{tpu_custom_call.1} parent=39 // pred_check
          %p292 = pneg %p59
        $region42: #{tpu_custom_call.1} parent=39 // pred_check_branch
          %294 = sbr.rel (%p292) target = $region44
        $region43: #{tpu_custom_call.1} parent=39 // pred_region
          %296 = dma.done %s288, 128
        $region44: #{tpu_custom_call.1} parent=39 // pred_fallthru
          _
        %s297 = sand.u32 %s26, 1
        %s298 = scalar_lea.sflag [#allocation8], %s297
        %s299 = sand.u32 %s74, 1
        %s300 = smul.addr %s299, 64
        %s301 = scalar_lea.vmem [#allocation7], %s300
        // Predicated region
        $region45: #{tpu_custom_call.1} parent=39 // pred_check
          %p302 = pneg %p87
        $region46: #{tpu_custom_call.1} parent=39 // pred_check_branch
          %304 = sbr.rel (%p302) target = $region48
        $region47: #{tpu_custom_call.1} parent=39 // pred_region
          %306 = dma.done %s298, 1024
        $region48: #{tpu_custom_call.1} parent=39 // pred_fallthru
          _
        // Predicated region
        $region49: #{tpu_custom_call.1} parent=39 // pred_check
          %p307 = pneg %p108
        $region50: #{tpu_custom_call.1} parent=39 // pred_check_branch
          %309 = sbr.rel (%p307) target = $region52
        $region51: #{tpu_custom_call.1} parent=39 // pred_region
          %311 = dma.done [#allocation8], 8192
        $region52: #{tpu_custom_call.1} parent=39 // pred_fallthru
          _
        // Predicated region
        $region53: #{tpu_custom_call.1} parent=39 // pred_check
          %p312 = pneg %p129
        $region54: #{tpu_custom_call.1} parent=39 // pred_check_branch
          %314 = sbr.rel (%p312) target = $region56
        $region55: #{tpu_custom_call.1} parent=39 // pred_region
          %316 = dma.done [#allocation11], 6144
        $region56: #{tpu_custom_call.1} parent=39 // pred_fallthru
          _
        // Predicated region
        $region57: #{tpu_custom_call.1} parent=39 // pred_check
          %p317 = pneg %p150
        $region58: #{tpu_custom_call.1} parent=39 // pred_check_branch
          %319 = sbr.rel (%p317) target = $region60
        $region59: #{tpu_custom_call.1} parent=39 // pred_region
          %321 = dma.done [#allocation11], 128
        $region60: #{tpu_custom_call.1} parent=39 // pred_fallthru
          _
        %s322 = sand.u32 %s46, 1
        %s323 = scalar_lea.sflag [#allocation5], %s322
        %s324 = sand.u32 %s46, 1
        %s325 = smul.addr %s324, 8
        %s326 = scalar_lea.vmem [#allocation4], %s325
        %p327 = pneg %p59
        %p328 = pneg %p56
        %s329 = sand.u32 %s26, 1
        %s330 = scalar_lea.sflag [#allocation8], %s329
        %s331 = sand.u32 %s74, 1
        %s332 = smul.addr %s331, 64
        %s333 = scalar_lea.vmem [#allocation7], %s332
        %p334 = pneg %p87
        %p335 = pneg %p84
        %p336 = pneg %p108
        %p337 = pneg %p105
        %p338 = pneg %p129
        %p339 = pneg %p126
        %p340 = pneg %p150
        %p341 = pneg %p147
        %p342 = pneg %p178
        %p343 = pneg %p175
        %s344 = sand.u32 %s165, 1
        %s345 = scalar_lea.sflag [#allocation6], %s344
        %s346 = sand.u32 %s165, 1
        %s347 = smul.addr %s346, 64
        %s348 = scalar_lea.vmem [#allocation13], %s347
        %s349 = smul.u32 8, %s31
        %s350 = smul.u32 8, %s31
        %v351 = vld [vmem:[#allocation12] sm:$0xff]
        %v352 = vperm.slane %v351, 3
        %p353 = scmp.eq.s32.totalorder %s31, 0
        // Predicated region
        $region61: #{tpu_custom_call.1} parent=39 // pred_check
          %p354 = pneg %p353
        $region62: #{tpu_custom_call.1} parent=39 // pred_check_branch
          %356 = sbr.rel (%p354) target = $region64
        $region63: #{tpu_custom_call.1} parent=39 // pred_region
          %v357 = vld [vmem:[%s291] sm:$0xff]
          %v358 = vld [vmem:[#allocation9] sm:$0xff]
          %v359 = vld [vmem:[#allocation9 + $0x8] sm:$0xff]
          %v360 = vld [vmem:[#allocation9 + $0x10] sm:$0xff]
          %v361 = vld [vmem:[#allocation9 + $0x18] sm:$0xff]
          %v362 = vld [vmem:[#allocation9 + $0x20] sm:$0xff]
          %v363 = vld [vmem:[#allocation9 + $0x28] sm:$0xff]
          %v364 = vld [vmem:[#allocation9 + $0x30] sm:$0xff]
          %v365 = vld [vmem:[#allocation9 + $0x38] sm:$0xff]
          %v366 = vld [vmem:[#allocation9 + $0x40] sm:$0xff]
          %v367 = vld [vmem:[#allocation9 + $0x48] sm:$0xff]
          %v368 = vld [vmem:[#allocation9 + $0x50] sm:$0xff]
          %v369 = vld [vmem:[#allocation9 + $0x58] sm:$0xff]
          %v370 = vld [vmem:[#allocation9 + $0x60] sm:$0xff]
          %v371 = vld [vmem:[#allocation9 + $0x68] sm:$0xff]
          %v372 = vld [vmem:[#allocation9 + $0x70] sm:$0xff]
          %v373 = vld [vmem:[#allocation9 + $0x78] sm:$0xff]
          %v374 = vperm.slane %v351, 0
          %375 = vmatpush.msra.mxu0 %v373
          %376 = vmatpush.msra.mxu0 %v372
          %377 = vmatpush.msra.mxu0 %v371
          %378 = vmatpush.msra.mxu0 %v370
          %379 = vmatpush.msra.mxu0 %v369
          %380 = vmatpush.msra.mxu0 %v368
          %381 = vmatpush.msra.mxu0 %v367
          %382 = vmatpush.msra.mxu0 %v366
          %383 = vmatpush.msra.mxu0 %v365
          %384 = vmatpush.msra.mxu0 %v364
          %385 = vmatpush.msra.mxu0 %v363
          %386 = vmatpush.msra.mxu0 %v362
          %387 = vmatpush.msra.mxu0 %v361
          %388 = vmatpush.msra.mxu0 %v360
          %389 = vmatpush.msra.mxu0 %v359
          %390 = vmatpush.msra.mxu0 %v358
          %391 = vmatmul.f32.gmra.mxu0 %v357
          %v392 = vpop.f32.mrf.mxu0
          %v393 = vadd.f32 %v374, %v392
          %394 = vdwg.mxu0
          %vm395 = vcmp.ge.f32.partialorder %v393, 0.0
          %v396 = vmul.f32 %v393, 0.1
          %v397 = vsel %vm395, %v393, %v396
          %s398 = scalar_lea.vmem [#allocation9], 128
          %v399 = vld [vmem:[%s398] sm:$0xff]
          %v400 = vld [vmem:[%s398 + $0x8] sm:$0xff]
          %v401 = vld [vmem:[%s398 + $0x10] sm:$0xff]
          %v402 = vld [vmem:[%s398 + $0x18] sm:$0xff]
          %v403 = vld [vmem:[%s398 + $0x20] sm:$0xff]
          %v404 = vld [vmem:[%s398 + $0x28] sm:$0xff]
          %v405 = vld [vmem:[%s398 + $0x30] sm:$0xff]
          %v406 = vld [vmem:[%s398 + $0x38] sm:$0xff]
          %v407 = vld [vmem:[%s398 + $0x40] sm:$0xff]
          %v408 = vld [vmem:[%s398 + $0x48] sm:$0xff]
          %v409 = vld [vmem:[%s398 + $0x50] sm:$0xff]
          %v410 = vld [vmem:[%s398 + $0x58] sm:$0xff]
          %v411 = vld [vmem:[%s398 + $0x60] sm:$0xff]
          %v412 = vld [vmem:[%s398 + $0x68] sm:$0xff]
          %v413 = vld [vmem:[%s398 + $0x70] sm:$0xff]
          %v414 = vld [vmem:[%s398 + $0x78] sm:$0xff]
          %v415 = vperm.slane %v351, 1
          %416 = vmatpush.msra.mxu0 %v414
          %417 = vmatpush.msra.mxu0 %v413
          %418 = vmatpush.msra.mxu0 %v412
          %419 = vmatpush.msra.mxu0 %v411
          %420 = vmatpush.msra.mxu0 %v410
          %421 = vmatpush.msra.mxu0 %v409
          %422 = vmatpush.msra.mxu0 %v408
          %423 = vmatpush.msra.mxu0 %v407
          %424 = vmatpush.msra.mxu0 %v406
          %425 = vmatpush.msra.mxu0 %v405
          %426 = vmatpush.msra.mxu0 %v404
          %427 = vmatpush.msra.mxu0 %v403
          %428 = vmatpush.msra.mxu0 %v402
          %429 = vmatpush.msra.mxu0 %v401
          %430 = vmatpush.msra.mxu0 %v400
          %431 = vmatpush.msra.mxu0 %v399
          %432 = vmatmul.f32.gmra.mxu0 %v397
          %v433 = vpop.f32.mrf.mxu0
          %v434 = vadd.f32 %v415, %v433
          %435 = vdwg.mxu0
          %vm436 = vcmp.ge.f32.partialorder %v434, 0.0
          %v437 = vmul.f32 %v434, 0.1
          %v438 = vsel %vm436, %v434, %v437
          %s439 = scalar_lea.vmem [#allocation9], 256
          %v440 = vld [vmem:[%s439] sm:$0xff]
          %v441 = vld [vmem:[%s439 + $0x8] sm:$0xff]
          %v442 = vld [vmem:[%s439 + $0x10] sm:$0xff]
          %v443 = vld [vmem:[%s439 + $0x18] sm:$0xff]
          %v444 = vld [vmem:[%s439 + $0x20] sm:$0xff]
          %v445 = vld [vmem:[%s439 + $0x28] sm:$0xff]
          %v446 = vld [vmem:[%s439 + $0x30] sm:$0xff]
          %v447 = vld [vmem:[%s439 + $0x38] sm:$0xff]
          %v448 = vld [vmem:[%s439 + $0x40] sm:$0xff]
          %v449 = vld [vmem:[%s439 + $0x48] sm:$0xff]
          %v450 = vld [vmem:[%s439 + $0x50] sm:$0xff]
          %v451 = vld [vmem:[%s439 + $0x58] sm:$0xff]
          %v452 = vld [vmem:[%s439 + $0x60] sm:$0xff]
          %v453 = vld [vmem:[%s439 + $0x68] sm:$0xff]
          %v454 = vld [vmem:[%s439 + $0x70] sm:$0xff]
          %v455 = vld [vmem:[%s439 + $0x78] sm:$0xff]
          %v456 = vperm.slane %v351, 2
          %457 = vmatpush.msra.mxu0 %v455
          %458 = vmatpush.msra.mxu0 %v454
          %459 = vmatpush.msra.mxu0 %v453
          %460 = vmatpush.msra.mxu0 %v452
          %461 = vmatpush.msra.mxu0 %v451
          %462 = vmatpush.msra.mxu0 %v450
          %463 = vmatpush.msra.mxu0 %v449
          %464 = vmatpush.msra.mxu0 %v448
          %465 = vmatpush.msra.mxu0 %v447
          %466 = vmatpush.msra.mxu0 %v446
          %467 = vmatpush.msra.mxu0 %v445
          %468 = vmatpush.msra.mxu0 %v444
          %469 = vmatpush.msra.mxu0 %v443
          %470 = vmatpush.msra.mxu0 %v442
          %471 = vmatpush.msra.mxu0 %v441
          %472 = vmatpush.msra.mxu0 %v440
          %473 = vmatmul.f32.gmra.mxu0 %v438
          %v474 = vpop.f32.mrf.mxu0
          %v475 = vadd.f32 %v456, %v474
          %476 = vdwg.mxu0
          %vm477 = vcmp.ge.f32.partialorder %v475, 0.0
          %v478 = vmul.f32 %v475, 0.1
          %v479 = vsel %vm477, %v475, %v478
          %480 = vst [vmem:[#allocation2] sm:$0xff] %v479
        $region64: #{tpu_custom_call.1} parent=39 // pred_fallthru
          _
        %v481 = vld [vmem:[%s301] sm:$0xff]
        %v482 = vld [vmem:[%s301 + $0x8] sm:$0xff]
        %v483 = vld [vmem:[%s301 + $0x10] sm:$0xff]
        %v484 = vld [vmem:[%s301 + $0x18] sm:$0xff]
        %v485 = vld [vmem:[%s301 + $0x20] sm:$0xff]
        %v486 = vld [vmem:[%s301 + $0x28] sm:$0xff]
        %v487 = vld [vmem:[%s301 + $0x30] sm:$0xff]
        %v488 = vld [vmem:[%s301 + $0x38] sm:$0xff]
        %s489 = scalar_lea.vmem [#allocation9], 384
        %v490 = vld [vmem:[%s489] sm:$0xff]
        %v491 = vld [vmem:[%s489 + $0x8] sm:$0xff]
        %v492 = vld [vmem:[%s489 + $0x10] sm:$0xff]
        %v493 = vld [vmem:[%s489 + $0x18] sm:$0xff]
        %v494 = vld [vmem:[%s489 + $0x20] sm:$0xff]
        %v495 = vld [vmem:[%s489 + $0x28] sm:$0xff]
        %v496 = vld [vmem:[%s489 + $0x30] sm:$0xff]
        %v497 = vld [vmem:[%s489 + $0x38] sm:$0xff]
        %v498 = vld [vmem:[%s489 + $0x40] sm:$0xff]
        %v499 = vld [vmem:[%s489 + $0x48] sm:$0xff]
        %v500 = vld [vmem:[%s489 + $0x50] sm:$0xff]
        %v501 = vld [vmem:[%s489 + $0x58] sm:$0xff]
        %v502 = vld [vmem:[%s489 + $0x60] sm:$0xff]
        %v503 = vld [vmem:[%s489 + $0x68] sm:$0xff]
        %v504 = vld [vmem:[%s489 + $0x70] sm:$0xff]
        %v505 = vld [vmem:[%s489 + $0x78] sm:$0xff]
        %506 = vmatpush.msra.mxu0 %v505
        %507 = vmatpush.msra.mxu0 %v504
        %508 = vmatpush.msra.mxu0 %v503
        %509 = vmatpush.msra.mxu0 %v502
        %510 = vmatpush.msra.mxu0 %v501
        %511 = vmatpush.msra.mxu0 %v500
        %512 = vmatpush.msra.mxu0 %v499
        %513 = vmatpush.msra.mxu0 %v498
        %514 = vmatpush.msra.mxu0 %v497
        %515 = vmatpush.msra.mxu0 %v496
        %516 = vmatpush.msra.mxu0 %v495
        %517 = vmatpush.msra.mxu0 %v494
        %518 = vmatpush.msra.mxu0 %v493
        %519 = vmatpush.msra.mxu0 %v492
        %520 = vmatpush.msra.mxu0 %v491
        %521 = vmatpush.msra.mxu0 %v490
        %522 = vmatmul.f32.gmra.mxu0 %v481
        %v523 = vpop.f32.mrf.mxu0
        %v524 = vadd.f32 0.0, %v523
        %525 = vmatmul.f32.gmra.mxu0 %v482
        %v526 = vpop.f32.mrf.mxu0
        %v527 = vadd.f32 0.0, %v526
        %528 = vmatmul.f32.gmra.mxu0 %v483
        %v529 = vpop.f32.mrf.mxu0
        %v530 = vadd.f32 0.0, %v529
        %531 = vmatmul.f32.gmra.mxu0 %v484
        %v532 = vpop.f32.mrf.mxu0
        %v533 = vadd.f32 0.0, %v532
        %534 = vmatmul.f32.gmra.mxu0 %v485
        %v535 = vpop.f32.mrf.mxu0
        %v536 = vadd.f32 0.0, %v535
        %537 = vmatmul.f32.gmra.mxu0 %v486
        %v538 = vpop.f32.mrf.mxu0
        %v539 = vadd.f32 0.0, %v538
        %540 = vmatmul.f32.gmra.mxu0 %v487
        %v541 = vpop.f32.mrf.mxu0
        %v542 = vadd.f32 0.0, %v541
        %543 = vmatmul.f32.gmra.mxu0 %v488
        %v544 = vpop.f32.mrf.mxu0
        %v545 = vadd.f32 0.0, %v544
        %546 = vdwg.mxu0
        %v547 = vld [vmem:[#allocation2] sm:$0xff]
        %v548 = vmul.f32 %v547, %v352
        %v549 = vadd.f32 %v548, %v524
        %550 = vst [vmem:[#allocation3] sm:$0xff] %v549
        %v551 = vmul.f32 %v549, %v352
        %v552 = vadd.f32 %v551, %v527
        %s553 = scalar_lea.vmem [#allocation3], 8
        %554 = vst [vmem:[%s553] sm:$0xff] %v552
        %v555 = vmul.f32 %v552, %v352
        %v556 = vadd.f32 %v555, %v530
        %s557 = scalar_lea.vmem [#allocation3], 16
        %558 = vst [vmem:[%s557] sm:$0xff] %v556
        %v559 = vmul.f32 %v556, %v352
        %v560 = vadd.f32 %v559, %v533
        %s561 = scalar_lea.vmem [#allocation3], 24
        %562 = vst [vmem:[%s561] sm:$0xff] %v560
        %v563 = vmul.f32 %v560, %v352
        %v564 = vadd.f32 %v563, %v536
        %s565 = scalar_lea.vmem [#allocation3], 32
        %566 = vst [vmem:[%s565] sm:$0xff] %v564
        %v567 = vmul.f32 %v564, %v352
        %v568 = vadd.f32 %v567, %v539
        %s569 = scalar_lea.vmem [#allocation3], 40
        %570 = vst [vmem:[%s569] sm:$0xff] %v568
        %v571 = vmul.f32 %v568, %v352
        %v572 = vadd.f32 %v571, %v542
        %s573 = scalar_lea.vmem [#allocation3], 48
        %574 = vst [vmem:[%s573] sm:$0xff] %v572
        %v575 = vmul.f32 %v572, %v352
        %v576 = vadd.f32 %v575, %v545
        %s577 = scalar_lea.vmem [#allocation3], 56
        %578 = vst [vmem:[%s577] sm:$0xff] %v576
        %579 = vst [vmem:[#allocation2] sm:$0xff] %v576
        %v580 = vld [vmem:[#allocation3] sm:$0xff]
        %v581 = vld [vmem:[#allocation3 + $0x8] sm:$0xff]
        %v582 = vld [vmem:[#allocation3 + $0x10] sm:$0xff]
        %v583 = vld [vmem:[#allocation3 + $0x18] sm:$0xff]
        %v584 = vld [vmem:[#allocation3 + $0x20] sm:$0xff]
        %v585 = vld [vmem:[#allocation3 + $0x28] sm:$0xff]
        %v586 = vld [vmem:[#allocation3 + $0x30] sm:$0xff]
        %v587 = vld [vmem:[#allocation3 + $0x38] sm:$0xff]
        %vm588 = vcmp.lt.f32.partialorder %v580, 0.0
        %vm589 = vcmp.lt.f32.partialorder %v581, 0.0
        %vm590 = vcmp.lt.f32.partialorder %v582, 0.0
        %vm591 = vcmp.lt.f32.partialorder %v583, 0.0
        %vm592 = vcmp.lt.f32.partialorder %v584, 0.0
        %vm593 = vcmp.lt.f32.partialorder %v585, 0.0
        %vm594 = vcmp.lt.f32.partialorder %v586, 0.0
        %vm595 = vcmp.lt.f32.partialorder %v587, 0.0
        %v596 = vmul.f32 %v580, 10.0
        %v597 = vmul.f32 %v581, 10.0
        %v598 = vmul.f32 %v582, 10.0
        %v599 = vmul.f32 %v583, 10.0
        %v600 = vmul.f32 %v584, 10.0
        %v601 = vmul.f32 %v585, 10.0
        %v602 = vmul.f32 %v586, 10.0
        %v603 = vmul.f32 %v587, 10.0
        %v604 = vsel %vm588, %v596, %v580
        %v605 = vsel %vm589, %v597, %v581
        %v606 = vsel %vm590, %v598, %v582
        %v607 = vsel %vm591, %v599, %v583
        %v608 = vsel %vm592, %v600, %v584
        %v609 = vsel %vm593, %v601, %v585
        %v610 = vsel %vm594, %v602, %v586
        %v611 = vsel %vm595, %v603, %v587
        %v612 = vperm.slane %v351, 2
        %v613 = vsub.f32 %v604, %v612
        %v614 = vsub.f32 %v605, %v612
        %v615 = vsub.f32 %v606, %v612
        %v616 = vsub.f32 %v607, %v612
        %v617 = vsub.f32 %v608, %v612
        %v618 = vsub.f32 %v609, %v612
        %v619 = vsub.f32 %v610, %v612
        %v620 = vsub.f32 %v611, %v612
        %v621 = vld [vmem:[#allocation10] sm:$0xff]
        %v622 = vld [vmem:[#allocation10 + $0x8] sm:$0xff]
        %v623 = vld [vmem:[#allocation10 + $0x10] sm:$0xff]
        %v624 = vld [vmem:[#allocation10 + $0x18] sm:$0xff]
        %v625 = vld [vmem:[#allocation10 + $0x20] sm:$0xff]
        %v626 = vld [vmem:[#allocation10 + $0x28] sm:$0xff]
        %v627 = vld [vmem:[#allocation10 + $0x30] sm:$0xff]
        %v628 = vld [vmem:[#allocation10 + $0x38] sm:$0xff]
        %v629 = vld [vmem:[#allocation10 + $0x40] sm:$0xff]
        %v630 = vld [vmem:[#allocation10 + $0x48] sm:$0xff]
        %v631 = vld [vmem:[#allocation10 + $0x50] sm:$0xff]
        %v632 = vld [vmem:[#allocation10 + $0x58] sm:$0xff]
        %v633 = vld [vmem:[#allocation10 + $0x60] sm:$0xff]
        %v634 = vld [vmem:[#allocation10 + $0x68] sm:$0xff]
        %v635 = vld [vmem:[#allocation10 + $0x70] sm:$0xff]
        %v636 = vld [vmem:[#allocation10 + $0x78] sm:$0xff]
        %637 = vmatpush.msra.mxu0 %v636
        %638 = vmatpush.msra.mxu0 %v635
        %639 = vmatpush.msra.mxu0 %v634
        %640 = vmatpush.msra.mxu0 %v633
        %641 = vmatpush.msra.mxu0 %v632
        %642 = vmatpush.msra.mxu0 %v631
        %643 = vmatpush.msra.mxu0 %v630
        %644 = vmatpush.msra.mxu0 %v629
        %645 = vmatpush.msra.mxu0 %v628
        %646 = vmatpush.msra.mxu0 %v627
        %647 = vmatpush.msra.mxu0 %v626
        %648 = vmatpush.msra.mxu0 %v625
        %649 = vmatpush.msra.mxu0 %v624
        %650 = vmatpush.msra.mxu0 %v623
        %651 = vmatpush.msra.mxu0 %v622
        %652 = vmatpush.msra.mxu0 %v621
        %653 = vmatmul.f32.gmra.mxu0 %v613
        %v654 = vpop.f32.mrf.mxu0
        %v655 = vadd.f32 0.0, %v654
        %656 = vmatmul.f32.gmra.mxu0 %v614
        %v657 = vpop.f32.mrf.mxu0
        %v658 = vadd.f32 0.0, %v657
        %659 = vmatmul.f32.gmra.mxu0 %v615
        %v660 = vpop.f32.mrf.mxu0
        %v661 = vadd.f32 0.0, %v660
        %662 = vmatmul.f32.gmra.mxu0 %v616
        %v663 = vpop.f32.mrf.mxu0
        %v664 = vadd.f32 0.0, %v663
        %665 = vmatmul.f32.gmra.mxu0 %v617
        %v666 = vpop.f32.mrf.mxu0
        %v667 = vadd.f32 0.0, %v666
        %668 = vmatmul.f32.gmra.mxu0 %v618
        %v669 = vpop.f32.mrf.mxu0
        %v670 = vadd.f32 0.0, %v669
        %671 = vmatmul.f32.gmra.mxu0 %v619
        %v672 = vpop.f32.mrf.mxu0
        %v673 = vadd.f32 0.0, %v672
        %674 = vmatmul.f32.gmra.mxu0 %v620
        %v675 = vpop.f32.mrf.mxu0
        %v676 = vadd.f32 0.0, %v675
        %677 = vdwg.mxu0
        %vm678 = vcmp.lt.f32.partialorder %v655, 0.0
        %vm679 = vcmp.lt.f32.partialorder %v658, 0.0
        %vm680 = vcmp.lt.f32.partialorder %v661, 0.0
        %vm681 = vcmp.lt.f32.partialorder %v664, 0.0
        %vm682 = vcmp.lt.f32.partialorder %v667, 0.0
        %vm683 = vcmp.lt.f32.partialorder %v670, 0.0
        %vm684 = vcmp.lt.f32.partialorder %v673, 0.0
        %vm685 = vcmp.lt.f32.partialorder %v676, 0.0
        %v686 = vmul.f32 %v655, 10.0
        %v687 = vmul.f32 %v658, 10.0
        %v688 = vmul.f32 %v661, 10.0
        %v689 = vmul.f32 %v664, 10.0
        %v690 = vmul.f32 %v667, 10.0
        %v691 = vmul.f32 %v670, 10.0
        %v692 = vmul.f32 %v673, 10.0
        %v693 = vmul.f32 %v676, 10.0
        %v694 = vsel %vm678, %v686, %v655
        %v695 = vsel %vm679, %v687, %v658
        %v696 = vsel %vm680, %v688, %v661
        %v697 = vsel %vm681, %v689, %v664
        %v698 = vsel %vm682, %v690, %v667
        %v699 = vsel %vm683, %v691, %v670
        %v700 = vsel %vm684, %v692, %v673
        %v701 = vsel %vm685, %v693, %v676
        %v702 = vperm.slane %v351, 1
        %v703 = vsub.f32 %v694, %v702
        %v704 = vsub.f32 %v695, %v702
        %v705 = vsub.f32 %v696, %v702
        %v706 = vsub.f32 %v697, %v702
        %v707 = vsub.f32 %v698, %v702
        %v708 = vsub.f32 %v699, %v702
        %v709 = vsub.f32 %v700, %v702
        %v710 = vsub.f32 %v701, %v702
        %s711 = scalar_lea.vmem [#allocation10], 128
        %v712 = vld [vmem:[%s711] sm:$0xff]
        %v713 = vld [vmem:[%s711 + $0x8] sm:$0xff]
        %v714 = vld [vmem:[%s711 + $0x10] sm:$0xff]
        %v715 = vld [vmem:[%s711 + $0x18] sm:$0xff]
        %v716 = vld [vmem:[%s711 + $0x20] sm:$0xff]
        %v717 = vld [vmem:[%s711 + $0x28] sm:$0xff]
        %v718 = vld [vmem:[%s711 + $0x30] sm:$0xff]
        %v719 = vld [vmem:[%s711 + $0x38] sm:$0xff]
        %v720 = vld [vmem:[%s711 + $0x40] sm:$0xff]
        %v721 = vld [vmem:[%s711 + $0x48] sm:$0xff]
        %v722 = vld [vmem:[%s711 + $0x50] sm:$0xff]
        %v723 = vld [vmem:[%s711 + $0x58] sm:$0xff]
        %v724 = vld [vmem:[%s711 + $0x60] sm:$0xff]
        %v725 = vld [vmem:[%s711 + $0x68] sm:$0xff]
        %v726 = vld [vmem:[%s711 + $0x70] sm:$0xff]
        %v727 = vld [vmem:[%s711 + $0x78] sm:$0xff]
        %728 = vmatpush.msra.mxu0 %v727
        %729 = vmatpush.msra.mxu0 %v726
        %730 = vmatpush.msra.mxu0 %v725
        %731 = vmatpush.msra.mxu0 %v724
        %732 = vmatpush.msra.mxu0 %v723
        %733 = vmatpush.msra.mxu0 %v722
        %734 = vmatpush.msra.mxu0 %v721
        %735 = vmatpush.msra.mxu0 %v720
        %736 = vmatpush.msra.mxu0 %v719
        %737 = vmatpush.msra.mxu0 %v718
        %738 = vmatpush.msra.mxu0 %v717
        %739 = vmatpush.msra.mxu0 %v716
        %740 = vmatpush.msra.mxu0 %v715
        %741 = vmatpush.msra.mxu0 %v714
        %742 = vmatpush.msra.mxu0 %v713
        %743 = vmatpush.msra.mxu0 %v712
        %744 = vmatmul.f32.gmra.mxu0 %v703
        %v745 = vpop.f32.mrf.mxu0
        %v746 = vadd.f32 0.0, %v745
        %747 = vmatmul.f32.gmra.mxu0 %v704
        %v748 = vpop.f32.mrf.mxu0
        %v749 = vadd.f32 0.0, %v748
        %750 = vmatmul.f32.gmra.mxu0 %v705
        %v751 = vpop.f32.mrf.mxu0
        %v752 = vadd.f32 0.0, %v751
        %753 = vmatmul.f32.gmra.mxu0 %v706
        %v754 = vpop.f32.mrf.mxu0
        %v755 = vadd.f32 0.0, %v754
        %756 = vmatmul.f32.gmra.mxu0 %v707
        %v757 = vpop.f32.mrf.mxu0
        %v758 = vadd.f32 0.0, %v757
        %759 = vmatmul.f32.gmra.mxu0 %v708
        %v760 = vpop.f32.mrf.mxu0
        %v761 = vadd.f32 0.0, %v760
        %762 = vmatmul.f32.gmra.mxu0 %v709
        %v763 = vpop.f32.mrf.mxu0
        %v764 = vadd.f32 0.0, %v763
        %765 = vmatmul.f32.gmra.mxu0 %v710
        %v766 = vpop.f32.mrf.mxu0
        %v767 = vadd.f32 0.0, %v766
        %768 = vdwg.mxu0
        %vm769 = vcmp.lt.f32.partialorder %v746, 0.0
        %vm770 = vcmp.lt.f32.partialorder %v749, 0.0
        %vm771 = vcmp.lt.f32.partialorder %v752, 0.0
        %vm772 = vcmp.lt.f32.partialorder %v755, 0.0
        %vm773 = vcmp.lt.f32.partialorder %v758, 0.0
        %vm774 = vcmp.lt.f32.partialorder %v761, 0.0
        %vm775 = vcmp.lt.f32.partialorder %v764, 0.0
        %vm776 = vcmp.lt.f32.partialorder %v767, 0.0
        %v777 = vmul.f32 %v746, 10.0
        %v778 = vmul.f32 %v749, 10.0
        %v779 = vmul.f32 %v752, 10.0
        %v780 = vmul.f32 %v755, 10.0
        %v781 = vmul.f32 %v758, 10.0
        %v782 = vmul.f32 %v761, 10.0
        %v783 = vmul.f32 %v764, 10.0
        %v784 = vmul.f32 %v767, 10.0
        %v785 = vsel %vm769, %v777, %v746
        %v786 = vsel %vm770, %v778, %v749
        %v787 = vsel %vm771, %v779, %v752
        %v788 = vsel %vm772, %v780, %v755
        %v789 = vsel %vm773, %v781, %v758
        %v790 = vsel %vm774, %v782, %v761
        %v791 = vsel %vm775, %v783, %v764
        %v792 = vsel %vm776, %v784, %v767
        %v793 = vperm.slane %v351, 0
        %v794 = vsub.f32 %v785, %v793
        %v795 = vsub.f32 %v786, %v793
        %v796 = vsub.f32 %v787, %v793
        %v797 = vsub.f32 %v788, %v793
        %v798 = vsub.f32 %v789, %v793
        %v799 = vsub.f32 %v790, %v793
        %v800 = vsub.f32 %v791, %v793
        %v801 = vsub.f32 %v792, %v793
        %s802 = scalar_lea.vmem [#allocation10], 256
        %v803 = vld [vmem:[%s802] sm:$0xff]
        %v804 = vld [vmem:[%s802 + $0x8] sm:$0xff]
        %v805 = vld [vmem:[%s802 + $0x10] sm:$0xff]
        %v806 = vld [vmem:[%s802 + $0x18] sm:$0xff]
        %v807 = vld [vmem:[%s802 + $0x20] sm:$0xff]
        %v808 = vld [vmem:[%s802 + $0x28] sm:$0xff]
        %v809 = vld [vmem:[%s802 + $0x30] sm:$0xff]
        %v810 = vld [vmem:[%s802 + $0x38] sm:$0xff]
        %v811 = vld [vmem:[%s802 + $0x40] sm:$0xff]
        %v812 = vld [vmem:[%s802 + $0x48] sm:$0xff]
        %v813 = vld [vmem:[%s802 + $0x50] sm:$0xff]
        %v814 = vld [vmem:[%s802 + $0x58] sm:$0xff]
        %v815 = vld [vmem:[%s802 + $0x60] sm:$0xff]
        %v816 = vld [vmem:[%s802 + $0x68] sm:$0xff]
        %v817 = vld [vmem:[%s802 + $0x70] sm:$0xff]
        %v818 = vld [vmem:[%s802 + $0x78] sm:$0xff]
        %819 = vmatpush.msra.mxu0 %v818
        %820 = vmatpush.msra.mxu0 %v817
        %821 = vmatpush.msra.mxu0 %v816
        %822 = vmatpush.msra.mxu0 %v815
        %823 = vmatpush.msra.mxu0 %v814
        %824 = vmatpush.msra.mxu0 %v813
        %825 = vmatpush.msra.mxu0 %v812
        %826 = vmatpush.msra.mxu0 %v811
        %827 = vmatpush.msra.mxu0 %v810
        %828 = vmatpush.msra.mxu0 %v809
        %829 = vmatpush.msra.mxu0 %v808
        %830 = vmatpush.msra.mxu0 %v807
        %831 = vmatpush.msra.mxu0 %v806
        %832 = vmatpush.msra.mxu0 %v805
        %833 = vmatpush.msra.mxu0 %v804
        %834 = vmatpush.msra.mxu0 %v803
        %835 = vmatmul.f32.gmra.mxu0 %v794
        %v836 = vpop.f32.mrf.mxu0
        %v837 = vadd.f32 0.0, %v836
        %838 = vmatmul.f32.gmra.mxu0 %v795
        %v839 = vpop.f32.mrf.mxu0
        %v840 = vadd.f32 0.0, %v839
        %841 = vmatmul.f32.gmra.mxu0 %v796
        %v842 = vpop.f32.mrf.mxu0
        %v843 = vadd.f32 0.0, %v842
        %844 = vmatmul.f32.gmra.mxu0 %v797
        %v845 = vpop.f32.mrf.mxu0
        %v846 = vadd.f32 0.0, %v845
        %847 = vmatmul.f32.gmra.mxu0 %v798
        %v848 = vpop.f32.mrf.mxu0
        %v849 = vadd.f32 0.0, %v848
        %850 = vmatmul.f32.gmra.mxu0 %v799
        %v851 = vpop.f32.mrf.mxu0
        %v852 = vadd.f32 0.0, %v851
        %853 = vmatmul.f32.gmra.mxu0 %v800
        %v854 = vpop.f32.mrf.mxu0
        %v855 = vadd.f32 0.0, %v854
        %856 = vmatmul.f32.gmra.mxu0 %v801
        %v857 = vpop.f32.mrf.mxu0
        %v858 = vadd.f32 0.0, %v857
        %859 = vdwg.mxu0
        %860 = vst [vmem:[%s348] sm:$0xff] %v837
        %861 = vst [vmem:[%s348 + $0x8] sm:$0xff] %v840
        %862 = vst [vmem:[%s348 + $0x10] sm:$0xff] %v843
        %863 = vst [vmem:[%s348 + $0x18] sm:$0xff] %v846
        %864 = vst [vmem:[%s348 + $0x20] sm:$0xff] %v849
        %865 = vst [vmem:[%s348 + $0x28] sm:$0xff] %v852
        %866 = vst [vmem:[%s348 + $0x30] sm:$0xff] %v855
        %867 = vst [vmem:[%s348 + $0x38] sm:$0xff] %v858
        %s868 = sand.u32 %s165, 1
        %s869 = scalar_lea.sflag [#allocation6], %s868
        %s870 = sand.u32 %s165, 1
        %s871 = smul.addr %s870, 64
        %s872 = scalar_lea.vmem [#allocation13], %s871
        // Predicated region
        $region65: #{tpu_custom_call.1} parent=39 // pred_check
          %p873 = pneg %p175
        $region66: #{tpu_custom_call.1} parent=39 // pred_check_branch
          %875 = sbr.rel (%p873) target = $region68
        $region67: #{tpu_custom_call.1} parent=39 // pred_region
          %s876 = smul.u32 8, %s31
          %878 = vsyncadd %s869, 0
          %s879 = smul.addr %s876, 2
          %s880 = sadd.s32 %s30, %s879
          %s881 = smul.addr %s880, 8
          %s882 = scalar_lea.hbm %s5, %s881
          %s883 = sshll.u32 %s872, 4
          %s884 = int_to_ptr.vmem [resolvable:$true] %s883
          %s885 = sshll.u32 %s882, 4
          %s886 = int_to_ptr.hbm [resolvable:$true] %s885
          %891 = dma.vmem_to_hbm [thread:$0]  %s884, 1024, %s886, %s869, 128, 256, 8
        $region68: #{tpu_custom_call.1} parent=39 // pred_fallthru
          _
      $region40: #{tpu_custom_call.1} parent=5 // pred_fallthru
        _
      %p892 = scmp.le.s32.totalorder 2, %s21
      // Predicated region
      $region69: #{tpu_custom_call.1} parent=5 // pred_check
        %p893 = pneg %p892
      $region70: #{tpu_custom_call.1} parent=5 // pred_check_branch
        %895 = sbr.rel (%p893) target = $region72
      $region71: #{tpu_custom_call.1} parent=5 // pred_region
        %s896 = ssub.s32 %s21, 2
        // Predicated region
        $region73: #{tpu_custom_call.1} parent=71 // pred_check
          %p897 = pneg %p181
        $region74: #{tpu_custom_call.1} parent=71 // pred_check_branch
          %899 = sbr.rel (%p897) target = $region76
        $region75: #{tpu_custom_call.1} parent=71 // pred_region
          %s900 = sand.u32 %s166, 1
          %s901 = scalar_lea.sflag [#allocation6], %s900
          %s902 = sand.u32 %s166, 1
          %s903 = smul.addr %s902, 64
          %s904 = scalar_lea.vmem [#allocation13], %s903
          %906 = dma.done %s901, 1024
        $region76: #{tpu_custom_call.1} parent=71 // pred_fallthru
          _
      $region72: #{tpu_custom_call.1} parent=5 // pred_fallthru
        _
    $region6: #{tpu_custom_call.1} parent=1 // loop_footer
      %s25 = sadd.s32 1, %s21
    $region7: #{tpu_custom_call.1} parent=1 // loop_footer_branch
      %20 = sbr.rel target = $region3
    $region8: #{tpu_custom_call.1} parent=1 // loop_exit
      _
    %907 = vsyncpa [#allocation5], 1
    %s908 = scalar_lea.sflag [#allocation5], 1
    %909 = vsyncpa %s908, 1
    %910 = vsyncpa [#allocation8], 1
    %s911 = scalar_lea.sflag [#allocation8], 1
    %912 = vsyncpa %s911, 1
    %913 = vsyncpa [#allocation11], 1
    %914 = vsyncpa [#allocation6], 1
    %s915 = scalar_lea.sflag [#allocation6], 1
    %916 = vsyncpa %s915, 1

</llo_original>
